<compile_context>
chip_gen: v7x
topology: tpu7x:2x2x1
jax: 0.10.0
libtpu: 0.0.40
codegen_flags: <defaults>
</compile_context>

<pallas_src>
import functools

import jax
import jax.numpy as jnp
from jax.experimental import pallas as pl
from jax.experimental.pallas import tpu as pltpu


# ----------------------------------------------------------------------------
# Pallas kernel: FiLM (elementwise) + 3-layer MLP, feature-major layout
# ----------------------------------------------------------------------------
def _pebble_kernel(s_ref, g_ref, bt_ref,
                   w1_ref, b1_ref, w2_ref, b2_ref, w3_ref, b3_ref,
                   out_ref):
    # FiLM modulation on the [F_pad, TM] tile (pure VPU work; padded rows are 0).
    x = g_ref[...] * s_ref[...] + bt_ref[...]
    x = x.astype(jnp.bfloat16)

    # Layer 1: [H1, F_pad] @ [F_pad, TM] -> [H1, TM], f32 accumulation.
    h = jnp.dot(w1_ref[...], x, preferred_element_type=jnp.float32) + b1_ref[...]
    h = jnp.maximum(h, 0.0).astype(jnp.bfloat16)

    # Layer 2 (dominant matmul): [H2, H1] @ [H1, TM] -> [H2, TM].
    h = jnp.dot(w2_ref[...], h, preferred_element_type=jnp.float32) + b2_ref[...]
    h = jnp.maximum(h, 0.0).astype(jnp.bfloat16)

    # Layer 3: [1, H2] @ [H2, TM] -> [1, TM]  (lane-dense output row).
    y = jnp.dot(w3_ref[...], h, preferred_element_type=jnp.float32)
    out_ref[...] = jnp.tanh(y + b3_ref[0, 0])


def _const_block(shape):
    # Weight block identical for every grid step (stays resident in VMEM).
    return pl.BlockSpec(shape, lambda i: tuple(0 for _ in shape))


@functools.partial(jax.jit, static_argnames=("tm",))
def pebble_pallas_forward(states_t, gamma_t, beta_t,
                          w1t, b1c, w2t, b2c, w3t, b3s, *, tm):
    """All row arrays are feature-major [F_pad, N_pad] with N_pad % tm == 0."""
    f_pad, n_pad = states_t.shape
    h1 = w1t.shape[0]
    h2 = w2t.shape[0]
    grid = (n_pad // tm,)

    row_spec = pl.BlockSpec((f_pad, tm), lambda i: (0, i))

    return pl.pallas_call(
        _pebble_kernel,
        out_shape=jax.ShapeDtypeStruct((1, n_pad), jnp.float32),
        grid_spec=pltpu.PrefetchScalarGridSpec(
            num_scalar_prefetch=0,
            grid=grid,
            in_specs=[
                row_spec,                      # states   [F_pad, TM]
                row_spec,                      # gamma    [F_pad, TM]
                row_spec,                      # beta     [F_pad, TM]
                _const_block((h1, f_pad)),     # W1^T (bf16)
                _const_block((h1, 1)),         # b1 column (f32)
                _const_block((h2, h1)),        # W2^T (bf16)
                _const_block((h2, 1)),         # b2 column (f32)
                _const_block((1, h2)),         # W3^T (bf16)
                pl.BlockSpec(memory_space=pltpu.MemorySpace.SMEM),  # b3 scalar
            ],
            out_specs=pl.BlockSpec((1, tm), lambda i: (0, i)),      # lane-dense
        ),
        compiler_params=pltpu.CompilerParams(
            dimension_semantics=("parallel",),
            vmem_limit_bytes=32 * 1024 * 1024,
        ),
    )(states_t, gamma_t, beta_t, w1t, b1c, w2t, b2c, w3t, b3s)


def _choose_tm(n):
    """Row tile (rows live on lanes, so TM is a multiple of 128).

    Big tiles amortize the ~0.35 us per-grid-step overhead and fill the MXU
    (multiple of 256 for v6e/v7x); we keep >= 2 grid steps whenever possible so
    both v7x TensorCores get work.  TM <= 2048 keeps intermediates well inside
    the 32 MiB scoped-VMEM budget on every generation.
    """
    for cand in (2048, 1024, 512, 256):
        if n >= 2 * cand:
            return cand
    return 128


# ----------------------------------------------------------------------------
# Glue: action encoding, parameter init / prep, wrapper matching PEBBLE.forward
# ----------------------------------------------------------------------------
def custom_action_encoding(action, n_actions, action_embedding_dim):
    """One-hot over n_actions, tiled along the feature axis to embedding_dim."""
    assert action_embedding_dim % n_actions == 0
    one_hot = jax.nn.one_hot(action, n_actions, dtype=jnp.float32)
    reps = action_embedding_dim // n_actions
    return jnp.tile(one_hot, (1,) * (one_hot.ndim - 1) + (reps,))


def init_pebble_params(key, feature_size, embed_dim, hidden_sizes, output_size):
    def linear(k, fan_in, fan_out):
        kw, kb = jax.random.split(k)
        lim = 1.0 / jnp.sqrt(fan_in)
        w = jax.random.uniform(kw, (fan_in, fan_out), jnp.float32, -lim, lim)
        b = jax.random.uniform(kb, (1, fan_out), jnp.float32, -lim, lim)
        return w, b

    ks = jax.random.split(key, 5)
    wg, bg = linear(ks[0], embed_dim, feature_size)        # FiLM gamma
    wb, bb = linear(ks[1], embed_dim, feature_size)        # FiLM beta
    w1, b1 = linear(ks[2], feature_size, hidden_sizes[0])
    w2, b2 = linear(ks[3], hidden_sizes[0], hidden_sizes[1])
    w3, b3 = linear(ks[4], hidden_sizes[1], output_size)
    return (wg, bg, wb, bb, w1, b1, w2, b2, w3, b3)


def _prepare_kernel_params(params, feature_size, f_pad):
    """Transpose / pad / cast weights for the feature-major bf16 kernel."""
    (_, _, _, _, w1, b1, w2, b2, w3, b3) = params
    w1p = jnp.pad(w1, ((0, f_pad - feature_size), (0, 0)))   # zero rows: no effect
    w1t = w1p.T.astype(jnp.bfloat16)                         # (H1, F_pad)
    b1c = b1.reshape(-1, 1).astype(jnp.float32)              # (H1, 1)
    w2t = w2.T.astype(jnp.bfloat16)                          # (H2, H1)
    b2c = b2.reshape(-1, 1).astype(jnp.float32)               # (H2, 1)
    w3t = w3.T.astype(jnp.bfloat16)                          # (1, H2)
    b3s = b3.reshape(1, 1).astype(jnp.float32)                # SMEM scalar
    return w1t, b1c, w2t, b2c, w3t, b3s


def pebble_forward(states, action, length, params, config):
    """Mirrors PEBBLE.forward(states, action, len) -> (reward, None, None)."""
    del length  # unused in the reference forward
    rl = config["REWARD_LEARNING"]
    n_actions = rl["n_actions"]
    embed_dim = rl["action_embedding_dim"]
    assert rl["is_FiLM"], "kernel implements the FiLM path"
    # TODO(synk): non-FiLM concat path (is_FiLM=False) is not implemented here.

    (wg, bg, wb, bb, *_rest) = params
    b, t, f = states.shape
    n = b * t

    # FiLM gamma/beta depend only on the discrete action: build (n_actions, F)
    # lookup tables once and gather per-row values (replaces K=8 in-kernel matmuls).
    enc = custom_action_encoding(jnp.arange(n_actions), n_actions, embed_dim)
    gamma_tab = enc @ wg + bg                                # (A, F)
    beta_tab = enc @ wb + bb                                 # (A, F)
    act = action.reshape(n)
    gamma_rows = jnp.take(gamma_tab, act, axis=0)            # (N, F)
    beta_rows = jnp.take(beta_tab, act, axis=0)              # (N, F)
    states2d = states.reshape(n, f).astype(jnp.float32)

    # Pad feature dim 25 -> 32 (sublane aligned) and rows to a multiple of tm,
    # then go feature-major so rows land on the 128-lane axis.
    tm = _choose_tm(n)
    n_pad = ((n + tm - 1) // tm) * tm
    f_pad = ((f + 7) // 8) * 8

    def pad_t(x2d):
        x2d = jnp.pad(x2d, ((0, n_pad - n), (0, f_pad - f)))
        return x2d.T                                          # [F_pad, N_pad]

    states_t = pad_t(states2d)
    gamma_t = pad_t(gamma_rows)
    beta_t = pad_t(beta_rows)

    kparams = _prepare_kernel_params(params, f, f_pad)
    out = pebble_pallas_forward(states_t, gamma_t, beta_t, *kparams, tm=tm)
    reward = out[0, :n].reshape(b, t, 1)
    return reward, None, None


# Pure-JAX reference (optionally with the same bf16 MXU-input casts as the kernel).
def pebble_reference(states, action, params, config, *, bf16_matmuls=True):
    rl = config["REWARD_LEARNING"]
    emb = custom_action_encoding(action, rl["n_actions"], rl["action_embedding_dim"])
    (wg, bg, wb, bb, w1, b1, w2, b2, w3, b3) = params
    gamma = emb @ wg + bg
    beta = emb @ wb + bb
    x = gamma * states + beta
    c = (lambda a: a.astype(jnp.bfloat16)) if bf16_matmuls else (lambda a: a)
    h = jnp.maximum(jnp.dot(c(x), c(w1), preferred_element_type=jnp.float32) + b1, 0.0)
    h = jnp.maximum(jnp.dot(c(h), c(w2), preferred_element_type=jnp.float32) + b2, 0.0)
    return jnp.tanh(jnp.dot(c(h), c(w3), preferred_element_type=jnp.float32) + b3)


if __name__ == "__main__":
    config = {
        "REWARD_LEARNING": {
            "n_actions": 4,
            "action_embedding_dim": 8,
            "feature_size": 25,
            "is_FiLM": True,
        }
    }
    feature_size = config["REWARD_LEARNING"]["feature_size"]   # == MLP input_size
    hidden_sizes = [256, 512]
    output_size = 1

    key = jax.random.PRNGKey(0)
    k_param, k_state, k_act = jax.random.split(key, 3)

    B, T = 2, 8
    states = jax.random.normal(k_state, (B, T, feature_size), dtype=jnp.float32)
    action = jax.random.randint(k_act, (B, T), 0,
                                config["REWARD_LEARNING"]["n_actions"], dtype=jnp.int32)
    lengths = jnp.full((B,), T, dtype=jnp.int32)

    params = init_pebble_params(
        k_param,
        feature_size,
        config["REWARD_LEARNING"]["action_embedding_dim"],
        hidden_sizes,
        output_size,
    )

    reward, _, _ = pebble_forward(states, action, lengths, params, config)
    reward = jax.block_until_ready(reward)
    assert reward.shape == (B, T, 1), reward.shape

    # Precision-matched reference (same bf16 MXU inputs, f32 accumulation).
    ref_bf16 = pebble_reference(states, action, params, config, bf16_matmuls=True)
    assert jnp.allclose(reward, ref_bf16, atol=1e-4, rtol=1e-4), "mismatch vs bf16 reference"

    # Loose sanity check against the full-f32 reference (bf16 inputs add tiny error).
    ref_f32 = pebble_reference(states, action, params, config, bf16_matmuls=False)
    assert jnp.allclose(reward, ref_f32, atol=5e-2), "mismatch vs f32 reference"

    print("KERNEL_OK")
</pallas_src>

<mosaic_0001>
module attributes {stable_mosaic.version = 11 : i64} {
  func.func @_pebble_kernel(%arg0: i32, %arg1: memref<32x128xf32, #tpu.memory_space<vmem>>, %arg2: memref<32x128xf32, #tpu.memory_space<vmem>>, %arg3: memref<32x128xf32, #tpu.memory_space<vmem>>, %arg4: memref<256x32xbf16, #tpu.memory_space<vmem>>, %arg5: memref<256x1xf32, #tpu.memory_space<vmem>>, %arg6: memref<512x256xbf16, #tpu.memory_space<vmem>>, %arg7: memref<512x1xf32, #tpu.memory_space<vmem>>, %arg8: memref<1x512xbf16, #tpu.memory_space<vmem>>, %arg9: memref<1x1xf32, #tpu.memory_space<smem>>, %arg10: memref<1x128xf32, #tpu.memory_space<vmem>>) attributes {dimension_semantics = [#tpu.dimension_semantics<parallel>], iteration_bounds = array<i64: 1>, scalar_prefetch = 0 : i64, scratch_operands = 0 : i64, tpu.core_type = #tpu.core_type<tc>, window_params = [{transform_indices = @transform_0, window_bounds = array<i64: 32, 128>}, {transform_indices = @transform_1, window_bounds = array<i64: 32, 128>}, {transform_indices = @transform_2, window_bounds = array<i64: 32, 128>}, {pipeline_mode = #tpu.pipeline_mode<synchronous>, transform_indices = @transform_3, window_bounds = array<i64: 256, 32>}, {pipeline_mode = #tpu.pipeline_mode<synchronous>, transform_indices = @transform_4, window_bounds = array<i64: 256, 1>}, {pipeline_mode = #tpu.pipeline_mode<synchronous>, transform_indices = @transform_5, window_bounds = array<i64: 512, 256>}, {pipeline_mode = #tpu.pipeline_mode<synchronous>, transform_indices = @transform_6, window_bounds = array<i64: 512, 1>}, {pipeline_mode = #tpu.pipeline_mode<synchronous>, transform_indices = @transform_7, window_bounds = array<i64: 1, 512>}, {transform_indices = @transform_8, window_bounds = array<i64: 1, 1>}, {transform_indices = @transform_9, window_bounds = array<i64: 1, 128>}]} {
    %c0 = arith.constant 0 : index
    %c0_0 = arith.constant 0 : index
    %0 = vector.load %arg2[%c0, %c0_0] : memref<32x128xf32, #tpu.memory_space<vmem>>, vector<32x128xf32>
    %c0_1 = arith.constant 0 : index
    %c0_2 = arith.constant 0 : index
    %1 = vector.load %arg1[%c0_1, %c0_2] : memref<32x128xf32, #tpu.memory_space<vmem>>, vector<32x128xf32>
    %2 = arith.mulf %0, %1 : vector<32x128xf32>
    %c0_3 = arith.constant 0 : index
    %c0_4 = arith.constant 0 : index
    %3 = vector.load %arg3[%c0_3, %c0_4] : memref<32x128xf32, #tpu.memory_space<vmem>>, vector<32x128xf32>
    %4 = arith.addf %2, %3 : vector<32x128xf32>
    %5 = arith.truncf %4 : vector<32x128xf32> to vector<32x128xbf16>
    %c0_5 = arith.constant 0 : index
    %c0_6 = arith.constant 0 : index
    %6 = vector.load %arg4[%c0_5, %c0_6] : memref<256x32xbf16, #tpu.memory_space<vmem>>, vector<256x32xbf16>
    %cst = arith.constant dense<0.000000e+00> : vector<256x128xf32>
    %7 = tpu.matmul %6, %5, %cst {dimension_numbers = #tpu.dot_dimension_numbers<[1], [0], [0], [1], [0, 0, 1, 1], [], []>} : vector<256x32xbf16>, vector<32x128xbf16>, vector<256x128xf32> -> vector<256x128xf32>
    %c0_7 = arith.constant 0 : index
    %c0_8 = arith.constant 0 : index
    %8 = vector.load %arg5[%c0_7, %c0_8] : memref<256x1xf32, #tpu.memory_space<vmem>>, vector<256x1xf32>
    %9 = vector.broadcast %8 : vector<256x1xf32> to vector<256x128xf32>
    %10 = arith.addf %7, %9 : vector<256x128xf32>
    %cst_9 = arith.constant 0.000000e+00 : f32
    %11 = vector.broadcast %cst_9 : f32 to vector<256x128xf32>
    %12 = arith.maximumf %10, %11 : vector<256x128xf32>
    %13 = arith.truncf %12 : vector<256x128xf32> to vector<256x128xbf16>
    %c0_10 = arith.constant 0 : index
    %c0_11 = arith.constant 0 : index
    %14 = vector.load %arg6[%c0_10, %c0_11] : memref<512x256xbf16, #tpu.memory_space<vmem>>, vector<512x256xbf16>
    %cst_12 = arith.constant dense<0.000000e+00> : vector<512x128xf32>
    %15 = tpu.matmul %14, %13, %cst_12 {dimension_numbers = #tpu.dot_dimension_numbers<[1], [0], [0], [1], [0, 0, 1, 1], [], []>} : vector<512x256xbf16>, vector<256x128xbf16>, vector<512x128xf32> -> vector<512x128xf32>
    %c0_13 = arith.constant 0 : index
    %c0_14 = arith.constant 0 : index
    %16 = vector.load %arg7[%c0_13, %c0_14] : memref<512x1xf32, #tpu.memory_space<vmem>>, vector<512x1xf32>
    %17 = vector.broadcast %16 : vector<512x1xf32> to vector<512x128xf32>
    %18 = arith.addf %15, %17 : vector<512x128xf32>
    %cst_15 = arith.constant 0.000000e+00 : f32
    %19 = vector.broadcast %cst_15 : f32 to vector<512x128xf32>
    %20 = arith.maximumf %18, %19 : vector<512x128xf32>
    %21 = arith.truncf %20 : vector<512x128xf32> to vector<512x128xbf16>
    %c0_16 = arith.constant 0 : index
    %c0_17 = arith.constant 0 : index
    %22 = vector.load %arg8[%c0_16, %c0_17] : memref<1x512xbf16, #tpu.memory_space<vmem>>, vector<1x512xbf16>
    %cst_18 = arith.constant dense<0.000000e+00> : vector<1x128xf32>
    %23 = tpu.matmul %22, %21, %cst_18 {dimension_numbers = #tpu.dot_dimension_numbers<[1], [0], [0], [1], [0, 0, 1, 1], [], []>} : vector<1x512xbf16>, vector<512x128xbf16>, vector<1x128xf32> -> vector<1x128xf32>
    %c0_19 = arith.constant 0 : index
    %c0_20 = arith.constant 0 : index
    %24 = memref.load %arg9[%c0_19, %c0_20] : memref<1x1xf32, #tpu.memory_space<smem>>
    %25 = vector.broadcast %24 : f32 to vector<1x128xf32>
    %26 = arith.addf %23, %25 : vector<1x128xf32>
    %27 = math.tanh %26 : vector<1x128xf32>
    %c0_21 = arith.constant 0 : index
    %c0_22 = arith.constant 0 : index
    %28 = vector.load %arg10[%c0_21, %c0_22] : memref<1x128xf32, #tpu.memory_space<vmem>>, vector<1x128xf32>
    tpu.vector_store %arg10[%c0_21, %c0_22], %27 {strides = array<i32>} : memref<1x128xf32, #tpu.memory_space<vmem>>, vector<1x128xf32>,
    return
  }
  func.func @transform_0(%arg0: i32) -> (i32, i32) {
    %c0_i32 = arith.constant 0 : i32
    %c0_i32_0 = arith.constant 0 : i32
    return %c0_i32, %arg0 : i32, i32
  }
  func.func @transform_1(%arg0: i32) -> (i32, i32) {
    %c0_i32 = arith.constant 0 : i32
    %c0_i32_0 = arith.constant 0 : i32
    return %c0_i32, %arg0 : i32, i32
  }
  func.func @transform_2(%arg0: i32) -> (i32, i32) {
    %c0_i32 = arith.constant 0 : i32
    %c0_i32_0 = arith.constant 0 : i32
    return %c0_i32, %arg0 : i32, i32
  }
  func.func @transform_3(%arg0: i32) -> (i32, i32) {
    %c0_i32 = arith.constant 0 : i32
    %c0_i32_0 = arith.constant 0 : i32
    %c0_i32_1 = arith.constant 0 : i32
    return %c0_i32, %c0_i32_0 : i32, i32
  }
  func.func @transform_4(%arg0: i32) -> (i32, i32) {
    %c0_i32 = arith.constant 0 : i32
    %c0_i32_0 = arith.constant 0 : i32
    %c0_i32_1 = arith.constant 0 : i32
    return %c0_i32, %c0_i32_0 : i32, i32
  }
  func.func @transform_5(%arg0: i32) -> (i32, i32) {
    %c0_i32 = arith.constant 0 : i32
    %c0_i32_0 = arith.constant 0 : i32
    %c0_i32_1 = arith.constant 0 : i32
    return %c0_i32, %c0_i32_0 : i32, i32
  }
  func.func @transform_6(%arg0: i32) -> (i32, i32) {
    %c0_i32 = arith.constant 0 : i32
    %c0_i32_0 = arith.constant 0 : i32
    %c0_i32_1 = arith.constant 0 : i32
    return %c0_i32, %c0_i32_0 : i32, i32
  }
  func.func @transform_7(%arg0: i32) -> (i32, i32) {
    %c0_i32 = arith.constant 0 : i32
    %c0_i32_0 = arith.constant 0 : i32
    %c0_i32_1 = arith.constant 0 : i32
    return %c0_i32, %c0_i32_0 : i32, i32
  }
  func.func @transform_8(%arg0: i32) -> (i32, i32) {
    %c0_i32 = arith.constant 0 : i32
    %c0_i32_0 = arith.constant 0 : i32
    %c0_i32_1 = arith.constant 0 : i32
    return %c0_i32, %c0_i32_0 : i32, i32
  }
  func.func @transform_9(%arg0: i32) -> (i32, i32) {
    %c0_i32 = arith.constant 0 : i32
    %c0_i32_0 = arith.constant 0 : i32
    return %c0_i32, %arg0 : i32, i32
  }
}

</mosaic_0001>

<llo_original>
// kernel: pebble_pallas_forward.1
$region0: #{pebble_pallas_forward.1}
  #allocation0 [shape = 'u32[]', space=smem, size = 0x4, offset = 0x4, fixed_abs, tag = 'smem constant byte address 0x4 - core index']
  #allocation1 [shape = 'u32[144,128]{1,0:T(1,128)}', space=vmem, size = 0x12000, scoped, tag = 'internal scratch']
  #allocation2 [shape = 'f32[1,1]{1,0:T(1,128)S(6)}', space=smem, size = 0x200, scoped, tag = 'scoped memory for pebble_pallas_forward.1']
  %s0 = inlined_call_operand.vmem [shape: f32[32,128], index: 0, kind: input, shape index: {}]
  %s1 = inlined_call_operand.vmem [shape: f32[32,128], index: 1, kind: input, shape index: {}]
  %s2 = inlined_call_operand.vmem [shape: f32[32,128], index: 2, kind: input, shape index: {}]
  %s3 = inlined_call_operand.vmem [shape: bf16[256,32], index: 3, kind: input, shape index: {}]
  %s4 = inlined_call_operand.vmem [shape: f32[256,1], index: 4, kind: input, shape index: {}]
  %s5 = inlined_call_operand.vmem [shape: bf16[512,256], index: 5, kind: input, shape index: {}]
  %s6 = inlined_call_operand.vmem [shape: f32[512,1], index: 6, kind: input, shape index: {}]
  %s7 = inlined_call_operand.vmem [shape: bf16[1,512], index: 7, kind: input, shape index: {}]
  %s8 = inlined_call_operand.<no memory space> [shape: f32[1,1], index: 8, kind: input, shape index: {}]
  %s9 = inlined_call_operand.hbm [shape: f32[1,128], index: 9, kind: output, shape index: {}]
  %s10 = sld [smem:[#allocation0]]
  $region46: #{pebble_pallas_forward.1} parent=0
    _
  %s12 = ssub.s32 1, %s10
  %s13 = scalar_select 0, %s12, %s10
  %14 = sst [smem:[#allocation2]] %s8
  $region1: #{pebble_pallas_forward.1} parent=0
    #allocation3 [shape = 'u8[512]{0}', space=vmem, size = 0x400, scoped, tag = 'output window, operand 0, single buffered']
    #allocation4 [shape = 's32[1]{0}', space=sflag, size = 0x4, scoped, tag = 'scoped memory for pebble_pallas_forward.1']
    %15 = vsyncpa [#allocation4], 0
    // Predicated region
    $region2: #{pebble_pallas_forward.1} parent=1 // pred_check
      _
    $region3: #{pebble_pallas_forward.1} parent=1 // pred_check_branch
      %17 = sbr.rel (0) target = $region5
    $region4: #{pebble_pallas_forward.1} parent=1 // pred_region
      _
    $region5: #{pebble_pallas_forward.1} parent=1 // pred_fallthru
      _
    // Predicated region
    $region6: #{pebble_pallas_forward.1} parent=1 // pred_check
      _
    $region7: #{pebble_pallas_forward.1} parent=1 // pred_check_branch
      %19 = sbr.rel (0) target = $region9
    $region8: #{pebble_pallas_forward.1} parent=1 // pred_region
      _
    $region9: #{pebble_pallas_forward.1} parent=1 // pred_fallthru
      _
    // Predicated region
    $region10: #{pebble_pallas_forward.1} parent=1 // pred_check
      _
    $region11: #{pebble_pallas_forward.1} parent=1 // pred_check_branch
      %21 = sbr.rel (0) target = $region13
    $region12: #{pebble_pallas_forward.1} parent=1 // pred_region
      _
    $region13: #{pebble_pallas_forward.1} parent=1 // pred_fallthru
      _
    // Predicated region
    $region14: #{pebble_pallas_forward.1} parent=1 // pred_check
      _
    $region15: #{pebble_pallas_forward.1} parent=1 // pred_check_branch
      %23 = sbr.rel (0) target = $region17
    $region16: #{pebble_pallas_forward.1} parent=1 // pred_region
      _
    $region17: #{pebble_pallas_forward.1} parent=1 // pred_fallthru
      _
    // Predicated region
    $region18: #{pebble_pallas_forward.1} parent=1 // pred_check
      _
    $region19: #{pebble_pallas_forward.1} parent=1 // pred_check_branch
      %25 = sbr.rel (0) target = $region21
    $region20: #{pebble_pallas_forward.1} parent=1 // pred_region
      _
    $region21: #{pebble_pallas_forward.1} parent=1 // pred_fallthru
      _
    // Predicated region
    $region22: #{pebble_pallas_forward.1} parent=1 // pred_check
      _
    $region23: #{pebble_pallas_forward.1} parent=1 // pred_check_branch
      %27 = sbr.rel (0) target = $region25
    $region24: #{pebble_pallas_forward.1} parent=1 // pred_region
      _
    $region25: #{pebble_pallas_forward.1} parent=1 // pred_fallthru
      _
    // Predicated region
    $region26: #{pebble_pallas_forward.1} parent=1 // pred_check
      _
    $region27: #{pebble_pallas_forward.1} parent=1 // pred_check_branch
      %29 = sbr.rel (0) target = $region29
    $region28: #{pebble_pallas_forward.1} parent=1 // pred_region
      _
    $region29: #{pebble_pallas_forward.1} parent=1 // pred_fallthru
      _
    // Predicated region
    $region30: #{pebble_pallas_forward.1} parent=1 // pred_check
      _
    $region31: #{pebble_pallas_forward.1} parent=1 // pred_check_branch
      %31 = sbr.rel (0) target = $region33
    $region32: #{pebble_pallas_forward.1} parent=1 // pred_region
      _
    $region33: #{pebble_pallas_forward.1} parent=1 // pred_fallthru
      _
    // Predicated region
    $region34: #{pebble_pallas_forward.1} parent=1 // pred_check
      _
    $region35: #{pebble_pallas_forward.1} parent=1 // pred_check_branch
      %33 = sbr.rel (0) target = $region37
    $region36: #{pebble_pallas_forward.1} parent=1 // pred_region
      _
    $region37: #{pebble_pallas_forward.1} parent=1 // pred_fallthru
      _
    %v35 = vld [vmem:[%s1] sm:$0xff]
    %v36 = vld [vmem:[%s1 + $0x8] sm:$0xff]
    %v37 = vld [vmem:[%s1 + $0x10] sm:$0xff]
    %v38 = vld [vmem:[%s1 + $0x18] sm:$0xff]
    %v39 = vld [vmem:[%s0] sm:$0xff]
    %v40 = vld [vmem:[%s0 + $0x8] sm:$0xff]
    %v41 = vld [vmem:[%s0 + $0x10] sm:$0xff]
    %v42 = vld [vmem:[%s0 + $0x18] sm:$0xff]
    %v43 = vmul.f32 %v35, %v39
    %v44 = vmul.f32 %v36, %v40
    %v45 = vmul.f32 %v37, %v41
    %v46 = vmul.f32 %v38, %v42
    %v47 = vld [vmem:[%s2] sm:$0xff]
    %v48 = vld [vmem:[%s2 + $0x8] sm:$0xff]
    %v49 = vld [vmem:[%s2 + $0x10] sm:$0xff]
    %v50 = vld [vmem:[%s2 + $0x18] sm:$0xff]
    %v51 = vadd.f32 %v43, %v47
    %v52 = vadd.f32 %v44, %v48
    %v53 = vadd.f32 %v45, %v49
    %v54 = vadd.f32 %v46, %v50
    %v55 = vpack.c.bf16 %v52, %v51
    %v56 = vpack.c.bf16 %v54, %v53
    %v57 = vld [vmem:[%s3] sm:$0xf]
    %v58 = vld [vmem:[%s3 + $0x4] sm:$0xf]
    %v59 = vld [vmem:[%s3 + $0x8] sm:$0xf]
    %v60 = vld [vmem:[%s3 + $0xc] sm:$0xf]
    %v61 = vld [vmem:[%s3 + $0x10] sm:$0xf]
    %v62 = vld [vmem:[%s3 + $0x14] sm:$0xf]
    %v63 = vld [vmem:[%s3 + $0x18] sm:$0xf]
    %v64 = vld [vmem:[%s3 + $0x1c] sm:$0xf]
    %v65 = vld [vmem:[%s3 + $0x20] sm:$0xf]
    %v66 = vld [vmem:[%s3 + $0x24] sm:$0xf]
    %v67 = vld [vmem:[%s3 + $0x28] sm:$0xf]
    %v68 = vld [vmem:[%s3 + $0x2c] sm:$0xf]
    %v69 = vld [vmem:[%s3 + $0x30] sm:$0xf]
    %v70 = vld [vmem:[%s3 + $0x34] sm:$0xf]
    %v71 = vld [vmem:[%s3 + $0x38] sm:$0xf]
    %v72 = vld [vmem:[%s3 + $0x3c] sm:$0xf]
    %v73 = vld [vmem:[%s3 + $0x40] sm:$0xf]
    %v74 = vld [vmem:[%s3 + $0x44] sm:$0xf]
    %v75 = vld [vmem:[%s3 + $0x48] sm:$0xf]
    %v76 = vld [vmem:[%s3 + $0x4c] sm:$0xf]
    %v77 = vld [vmem:[%s3 + $0x50] sm:$0xf]
    %v78 = vld [vmem:[%s3 + $0x54] sm:$0xf]
    %v79 = vld [vmem:[%s3 + $0x58] sm:$0xf]
    %v80 = vld [vmem:[%s3 + $0x5c] sm:$0xf]
    %v81 = vld [vmem:[%s3 + $0x60] sm:$0xf]
    %v82 = vld [vmem:[%s3 + $0x64] sm:$0xf]
    %v83 = vld [vmem:[%s3 + $0x68] sm:$0xf]
    %v84 = vld [vmem:[%s3 + $0x6c] sm:$0xf]
    %v85 = vld [vmem:[%s3 + $0x70] sm:$0xf]
    %v86 = vld [vmem:[%s3 + $0x74] sm:$0xf]
    %v87 = vld [vmem:[%s3 + $0x78] sm:$0xf]
    %v88 = vld [vmem:[%s3 + $0x7c] sm:$0xf]
    %v89 = vld [vmem:[%s4] sm:$0xff]
    %v90 = vld [vmem:[%s4 + $0x8] sm:$0xff]
    %v91 = vld [vmem:[%s4 + $0x10] sm:$0xff]
    %v92 = vld [vmem:[%s4 + $0x18] sm:$0xff]
    %v93 = vld [vmem:[%s4 + $0x20] sm:$0xff]
    %v94 = vld [vmem:[%s4 + $0x28] sm:$0xff]
    %v95 = vld [vmem:[%s4 + $0x30] sm:$0xff]
    %v96 = vld [vmem:[%s4 + $0x38] sm:$0xff]
    %v97 = vld [vmem:[%s4 + $0x40] sm:$0xff]
    %v98 = vld [vmem:[%s4 + $0x48] sm:$0xff]
    %v99 = vld [vmem:[%s4 + $0x50] sm:$0xff]
    %v100 = vld [vmem:[%s4 + $0x58] sm:$0xff]
    %v101 = vld [vmem:[%s4 + $0x60] sm:$0xff]
    %v102 = vld [vmem:[%s4 + $0x68] sm:$0xff]
    %v103 = vld [vmem:[%s4 + $0x70] sm:$0xff]
    %v104 = vld [vmem:[%s4 + $0x78] sm:$0xff]
    %v105 = vld [vmem:[%s4 + $0x80] sm:$0xff]
    %v106 = vld [vmem:[%s4 + $0x88] sm:$0xff]
    %v107 = vld [vmem:[%s4 + $0x90] sm:$0xff]
    %v108 = vld [vmem:[%s4 + $0x98] sm:$0xff]
    %v109 = vld [vmem:[%s4 + $0xa0] sm:$0xff]
    %v110 = vld [vmem:[%s4 + $0xa8] sm:$0xff]
    %v111 = vld [vmem:[%s4 + $0xb0] sm:$0xff]
    %v112 = vld [vmem:[%s4 + $0xb8] sm:$0xff]
    %v113 = vld [vmem:[%s4 + $0xc0] sm:$0xff]
    %v114 = vld [vmem:[%s4 + $0xc8] sm:$0xff]
    %v115 = vld [vmem:[%s4 + $0xd0] sm:$0xff]
    %v116 = vld [vmem:[%s4 + $0xd8] sm:$0xff]
    %v117 = vld [vmem:[%s4 + $0xe0] sm:$0xff]
    %v118 = vld [vmem:[%s4 + $0xe8] sm:$0xff]
    %v119 = vld [vmem:[%s4 + $0xf0] sm:$0xff]
    %v120 = vld [vmem:[%s4 + $0xf8] sm:$0xff]
    %122 = vset.pattern.permute.xlu0 0
    %123 = vperm.xlu0 %122, %v89
    %v124 = vpop.permute.xlu0 %123
    %127 = vset.pattern.permute.xlu0 0
    %128 = vperm.xlu0 %127, %v90
    %v129 = vpop.permute.xlu0 %128
    %132 = vset.pattern.permute.xlu0 0
    %133 = vperm.xlu0 %132, %v91
    %v134 = vpop.permute.xlu0 %133
    %137 = vset.pattern.permute.xlu0 0
    %138 = vperm.xlu0 %137, %v92
    %v139 = vpop.permute.xlu0 %138
    %142 = vset.pattern.permute.xlu0 0
    %143 = vperm.xlu0 %142, %v93
    %v144 = vpop.permute.xlu0 %143
    %147 = vset.pattern.permute.xlu0 0
    %148 = vperm.xlu0 %147, %v94
    %v149 = vpop.permute.xlu0 %148
    %152 = vset.pattern.permute.xlu0 0
    %153 = vperm.xlu0 %152, %v95
    %v154 = vpop.permute.xlu0 %153
    %157 = vset.pattern.permute.xlu0 0
    %158 = vperm.xlu0 %157, %v96
    %v159 = vpop.permute.xlu0 %158
    %162 = vset.pattern.permute.xlu0 0
    %163 = vperm.xlu0 %162, %v97
    %v164 = vpop.permute.xlu0 %163
    %167 = vset.pattern.permute.xlu0 0
    %168 = vperm.xlu0 %167, %v98
    %v169 = vpop.permute.xlu0 %168
    %172 = vset.pattern.permute.xlu0 0
    %173 = vperm.xlu0 %172, %v99
    %v174 = vpop.permute.xlu0 %173
    %177 = vset.pattern.permute.xlu0 0
    %178 = vperm.xlu0 %177, %v100
    %v179 = vpop.permute.xlu0 %178
    %182 = vset.pattern.permute.xlu0 0
    %183 = vperm.xlu0 %182, %v101
    %v184 = vpop.permute.xlu0 %183
    %187 = vset.pattern.permute.xlu0 0
    %188 = vperm.xlu0 %187, %v102
    %v189 = vpop.permute.xlu0 %188
    %192 = vset.pattern.permute.xlu0 0
    %193 = vperm.xlu0 %192, %v103
    %v194 = vpop.permute.xlu0 %193
    %197 = vset.pattern.permute.xlu0 0
    %198 = vperm.xlu0 %197, %v104
    %v199 = vpop.permute.xlu0 %198
    %202 = vset.pattern.permute.xlu0 0
    %203 = vperm.xlu0 %202, %v105
    %v204 = vpop.permute.xlu0 %203
    %207 = vset.pattern.permute.xlu0 0
    %208 = vperm.xlu0 %207, %v106
    %v209 = vpop.permute.xlu0 %208
    %212 = vset.pattern.permute.xlu0 0
    %213 = vperm.xlu0 %212, %v107
    %v214 = vpop.permute.xlu0 %213
    %217 = vset.pattern.permute.xlu0 0
    %218 = vperm.xlu0 %217, %v108
    %v219 = vpop.permute.xlu0 %218
    %222 = vset.pattern.permute.xlu0 0
    %223 = vperm.xlu0 %222, %v109
    %v224 = vpop.permute.xlu0 %223
    %227 = vset.pattern.permute.xlu0 0
    %228 = vperm.xlu0 %227, %v110
    %v229 = vpop.permute.xlu0 %228
    %232 = vset.pattern.permute.xlu0 0
    %233 = vperm.xlu0 %232, %v111
    %v234 = vpop.permute.xlu0 %233
    %237 = vset.pattern.permute.xlu0 0
    %238 = vperm.xlu0 %237, %v112
    %v239 = vpop.permute.xlu0 %238
    %242 = vset.pattern.permute.xlu0 0
    %243 = vperm.xlu0 %242, %v113
    %v244 = vpop.permute.xlu0 %243
    %247 = vset.pattern.permute.xlu0 0
    %248 = vperm.xlu0 %247, %v114
    %v249 = vpop.permute.xlu0 %248
    %252 = vset.pattern.permute.xlu0 0
    %253 = vperm.xlu0 %252, %v115
    %v254 = vpop.permute.xlu0 %253
    %257 = vset.pattern.permute.xlu0 0
    %258 = vperm.xlu0 %257, %v116
    %v259 = vpop.permute.xlu0 %258
    %262 = vset.pattern.permute.xlu0 0
    %263 = vperm.xlu0 %262, %v117
    %v264 = vpop.permute.xlu0 %263
    %267 = vset.pattern.permute.xlu0 0
    %268 = vperm.xlu0 %267, %v118
    %v269 = vpop.permute.xlu0 %268
    %272 = vset.pattern.permute.xlu0 0
    %273 = vperm.xlu0 %272, %v119
    %v274 = vpop.permute.xlu0 %273
    %277 = vset.pattern.permute.xlu0 0
    %278 = vperm.xlu0 %277, %v120
    %v279 = vpop.permute.xlu0 %278
    %v313 = vunpack.c.l.b16 %v57
    %v314 = vunpack.c.l.b16 %v58
    %v315 = vunpack.c.l.b16 %v59
    %v316 = vunpack.c.l.b16 %v60
    %v317 = vunpack.c.l.b16 %v61
    %v318 = vunpack.c.l.b16 %v62
    %v319 = vunpack.c.l.b16 %v63
    %v320 = vunpack.c.l.b16 %v64
    %v321 = vunpack.c.l.b16 %v65
    %v322 = vunpack.c.l.b16 %v66
    %v323 = vunpack.c.l.b16 %v67
    %v324 = vunpack.c.l.b16 %v68
    %v325 = vunpack.c.l.b16 %v69
    %v326 = vunpack.c.l.b16 %v70
    %v327 = vunpack.c.l.b16 %v71
    %v328 = vunpack.c.l.b16 %v72
    %v329 = vunpack.c.l.b16 %v73
    %v330 = vunpack.c.l.b16 %v74
    %v331 = vunpack.c.l.b16 %v75
    %v332 = vunpack.c.l.b16 %v76
    %v333 = vunpack.c.l.b16 %v77
    %v334 = vunpack.c.l.b16 %v78
    %v335 = vunpack.c.l.b16 %v79
    %v336 = vunpack.c.l.b16 %v80
    %v337 = vunpack.c.l.b16 %v81
    %v338 = vunpack.c.l.b16 %v82
    %v339 = vunpack.c.l.b16 %v83
    %v340 = vunpack.c.l.b16 %v84
    %v341 = vunpack.c.l.b16 %v85
    %v342 = vunpack.c.l.b16 %v86
    %v343 = vunpack.c.l.b16 %v87
    %v344 = vunpack.c.l.b16 %v88
    %v345 = vpack.c.b16 %v314, %v313
    %v346 = vpack.c.b16 %v316, %v315
    %v347 = vpack.c.b16 %v318, %v317
    %v348 = vpack.c.b16 %v320, %v319
    %v349 = vpack.c.b16 %v322, %v321
    %v350 = vpack.c.b16 %v324, %v323
    %v351 = vpack.c.b16 %v326, %v325
    %v352 = vpack.c.b16 %v328, %v327
    %v353 = vpack.c.b16 %v330, %v329
    %v354 = vpack.c.b16 %v332, %v331
    %v355 = vpack.c.b16 %v334, %v333
    %v356 = vpack.c.b16 %v336, %v335
    %v357 = vpack.c.b16 %v338, %v337
    %v358 = vpack.c.b16 %v340, %v339
    %v359 = vpack.c.b16 %v342, %v341
    %v360 = vpack.c.b16 %v344, %v343
    %vm361 = vcmask 261120
    %v363 = vsel %vm361, %v345, 0
    %v366 = vsel %vm361, %v346, 0
    %v369 = vsel %vm361, %v347, 0
    %v372 = vsel %vm361, %v348, 0
    %v375 = vsel %vm361, %v349, 0
    %v378 = vsel %vm361, %v350, 0
    %v381 = vsel %vm361, %v351, 0
    %v384 = vsel %vm361, %v352, 0
    %v387 = vsel %vm361, %v353, 0
    %v390 = vsel %vm361, %v354, 0
    %v393 = vsel %vm361, %v355, 0
    %v396 = vsel %vm361, %v356, 0
    %v399 = vsel %vm361, %v357, 0
    %v402 = vsel %vm361, %v358, 0
    %v405 = vsel %vm361, %v359, 0
    %v408 = vsel %vm361, %v360, 0
    %410 = vmatprep.subr.bf16.mxu0 0
    %411 = vmatpush1.bf16.msra.mxu0 %v55
    %412 = vmatprep.subr.bf16.mxu0 0
    %413 = vmatpush1.bf16.msra.mxu0 %v56
    %414 = vmatprep.subr.bf16.mxu0 0
    %415 = vmatpush1.bf16.msra.mxu0 0
    %416 = vmatprep.subr.bf16.mxu0 0
    %417 = vmatpush1.bf16.msra.mxu0 0
    %418 = vmatprep.subr.bf16.mxu0 0
    %419 = vmatpush1.bf16.msra.mxu0 0
    %420 = vmatprep.subr.bf16.mxu0 0
    %421 = vmatpush1.bf16.msra.mxu0 0
    %422 = vmatprep.subr.bf16.mxu0 0
    %423 = vmatpush1.bf16.msra.mxu0 0
    %424 = vmatprep.subr.bf16.mxu0 0
    %425 = vmatpush1.bf16.msra.mxu0 0
    %426 = vmatprep.subr.bf16.mxu0 0
    %427 = vmatpush1.bf16.msra.mxu0 0
    %428 = vmatprep.subr.bf16.mxu0 0
    %429 = vmatpush1.bf16.msra.mxu0 0
    %430 = vmatprep.subr.bf16.mxu0 0
    %431 = vmatpush1.bf16.msra.mxu0 0
    %432 = vmatprep.subr.bf16.mxu0 0
    %433 = vmatpush1.bf16.msra.mxu0 0
    %434 = vmatprep.subr.bf16.mxu0 0
    %435 = vmatpush1.bf16.msra.mxu0 0
    %436 = vmatprep.subr.bf16.mxu0 0
    %437 = vmatpush1.bf16.msra.mxu0 0
    %438 = vmatprep.subr.bf16.mxu0 0
    %439 = vmatpush1.bf16.msra.mxu0 0
    %440 = vmatprep.subr.bf16.mxu0 0
    %441 = vmatpush1.bf16.msra.mxu0 0
    %442 = vmatprep.mubr.bf16.mxu0 0
    %443 = vmatmul.mubr.bf16.gmra.mrb[0].mxu0 %v363
    %v444 = vpop.f32.mrb[0].mxu0
    %v445 = vadd.f32 %v124, %v444
    %v446 = vpop.f32.mrb[0].mxu0
    %v447 = vpop.f32.mrb[0].mxu0
    %v448 = vadd.f32 %v129, %v447
    %v449 = vpop.f32.mrb[0].mxu0
    %450 = vmatprep.mubr.bf16.mxu0 0
    %451 = vmatmul.mubr.bf16.gmra.mrb[0].mxu0 %v366
    %v452 = vpop.f32.mrb[0].mxu0
    %v453 = vadd.f32 %v134, %v452
    %v454 = vpop.f32.mrb[0].mxu0
    %v455 = vpop.f32.mrb[0].mxu0
    %v456 = vadd.f32 %v139, %v455
    %v457 = vpop.f32.mrb[0].mxu0
    %458 = vmatprep.mubr.bf16.mxu0 0
    %459 = vmatmul.mubr.bf16.gmra.mrb[0].mxu0 %v369
    %v460 = vpop.f32.mrb[0].mxu0
    %v461 = vadd.f32 %v144, %v460
    %v462 = vpop.f32.mrb[0].mxu0
    %v463 = vpop.f32.mrb[0].mxu0
    %v464 = vadd.f32 %v149, %v463
    %v465 = vpop.f32.mrb[0].mxu0
    %466 = vmatprep.mubr.bf16.mxu0 0
    %467 = vmatmul.mubr.bf16.gmra.mrb[0].mxu0 %v372
    %v468 = vpop.f32.mrb[0].mxu0
    %v469 = vadd.f32 %v154, %v468
    %v470 = vpop.f32.mrb[0].mxu0
    %v471 = vpop.f32.mrb[0].mxu0
    %v472 = vadd.f32 %v159, %v471
    %v473 = vpop.f32.mrb[0].mxu0
    %474 = vmatprep.mubr.bf16.mxu0 0
    %475 = vmatmul.mubr.bf16.gmra.mrb[0].mxu0 %v375
    %v476 = vpop.f32.mrb[0].mxu0
    %v477 = vadd.f32 %v164, %v476
    %v478 = vpop.f32.mrb[0].mxu0
    %v479 = vpop.f32.mrb[0].mxu0
    %v480 = vadd.f32 %v169, %v479
    %v481 = vpop.f32.mrb[0].mxu0
    %482 = vmatprep.mubr.bf16.mxu0 0
    %483 = vmatmul.mubr.bf16.gmra.mrb[0].mxu0 %v378
    %v484 = vpop.f32.mrb[0].mxu0
    %v485 = vadd.f32 %v174, %v484
    %v486 = vpop.f32.mrb[0].mxu0
    %v487 = vpop.f32.mrb[0].mxu0
    %v488 = vadd.f32 %v179, %v487
    %v489 = vpop.f32.mrb[0].mxu0
    %490 = vmatprep.mubr.bf16.mxu0 0
    %491 = vmatmul.mubr.bf16.gmra.mrb[0].mxu0 %v381
    %v492 = vpop.f32.mrb[0].mxu0
    %v493 = vadd.f32 %v184, %v492
    %v494 = vpop.f32.mrb[0].mxu0
    %v495 = vpop.f32.mrb[0].mxu0
    %v496 = vadd.f32 %v189, %v495
    %v497 = vpop.f32.mrb[0].mxu0
    %498 = vmatprep.mubr.bf16.mxu0 0
    %499 = vmatmul.mubr.bf16.gmra.mrb[0].mxu0 %v384
    %v500 = vpop.f32.mrb[0].mxu0
    %v501 = vadd.f32 %v194, %v500
    %v502 = vpop.f32.mrb[0].mxu0
    %v503 = vpop.f32.mrb[0].mxu0
    %v504 = vadd.f32 %v199, %v503
    %v505 = vpop.f32.mrb[0].mxu0
    %506 = vmatprep.mubr.bf16.mxu0 0
    %507 = vmatmul.mubr.bf16.gmra.mrb[0].mxu0 %v387
    %v508 = vpop.f32.mrb[0].mxu0
    %v509 = vadd.f32 %v204, %v508
    %v510 = vpop.f32.mrb[0].mxu0
    %v511 = vpop.f32.mrb[0].mxu0
    %v512 = vadd.f32 %v209, %v511
    %v513 = vpop.f32.mrb[0].mxu0
    %514 = vmatprep.mubr.bf16.mxu0 0
    %515 = vmatmul.mubr.bf16.gmra.mrb[0].mxu0 %v390
    %v516 = vpop.f32.mrb[0].mxu0
    %v517 = vadd.f32 %v214, %v516
    %v518 = vpop.f32.mrb[0].mxu0
    %v519 = vpop.f32.mrb[0].mxu0
    %v520 = vadd.f32 %v219, %v519
    %v521 = vpop.f32.mrb[0].mxu0
    %522 = vmatprep.mubr.bf16.mxu0 0
    %523 = vmatmul.mubr.bf16.gmra.mrb[0].mxu0 %v393
    %v524 = vpop.f32.mrb[0].mxu0
    %v525 = vadd.f32 %v224, %v524
    %v526 = vpop.f32.mrb[0].mxu0
    %v527 = vpop.f32.mrb[0].mxu0
    %v528 = vadd.f32 %v229, %v527
    %v529 = vpop.f32.mrb[0].mxu0
    %530 = vmatprep.mubr.bf16.mxu0 0
    %531 = vmatmul.mubr.bf16.gmra.mrb[0].mxu0 %v396
    %v532 = vpop.f32.mrb[0].mxu0
    %v533 = vadd.f32 %v234, %v532
    %v534 = vpop.f32.mrb[0].mxu0
    %v535 = vpop.f32.mrb[0].mxu0
    %v536 = vadd.f32 %v239, %v535
    %v537 = vpop.f32.mrb[0].mxu0
    %538 = vmatprep.mubr.bf16.mxu0 0
    %539 = vmatmul.mubr.bf16.gmra.mrb[0].mxu0 %v399
    %v540 = vpop.f32.mrb[0].mxu0
    %v541 = vadd.f32 %v244, %v540
    %v542 = vpop.f32.mrb[0].mxu0
    %v543 = vpop.f32.mrb[0].mxu0
    %v544 = vadd.f32 %v249, %v543
    %v545 = vpop.f32.mrb[0].mxu0
    %546 = vmatprep.mubr.bf16.mxu0 0
    %547 = vmatmul.mubr.bf16.gmra.mrb[0].mxu0 %v402
    %v548 = vpop.f32.mrb[0].mxu0
    %v549 = vadd.f32 %v254, %v548
    %v550 = vpop.f32.mrb[0].mxu0
    %v551 = vpop.f32.mrb[0].mxu0
    %v552 = vadd.f32 %v259, %v551
    %v553 = vpop.f32.mrb[0].mxu0
    %554 = vmatprep.mubr.bf16.mxu0 0
    %555 = vmatmul.mubr.bf16.gmra.mrb[0].mxu0 %v405
    %v556 = vpop.f32.mrb[0].mxu0
    %v557 = vadd.f32 %v264, %v556
    %v558 = vpop.f32.mrb[0].mxu0
    %v559 = vpop.f32.mrb[0].mxu0
    %v560 = vadd.f32 %v269, %v559
    %v561 = vpop.f32.mrb[0].mxu0
    %562 = vmatprep.mubr.bf16.mxu0 0
    %563 = vmatmul.mubr.bf16.gmra.mrb[0].mxu0 %v408
    %v564 = vpop.f32.mrb[0].mxu0
    %v565 = vadd.f32 %v274, %v564
    %v566 = vpop.f32.mrb[0].mxu0
    %v567 = vpop.f32.mrb[0].mxu0
    %v568 = vadd.f32 %v279, %v567
    %v569 = vpop.f32.mrb[0].mxu0
    %570 = vdwg.mxu0
    %v571 = vmax.f32 %v445, 0.0
    %v572 = vmax.f32 %v448, 0.0
    %v573 = vmax.f32 %v453, 0.0
    %v574 = vmax.f32 %v456, 0.0
    %v575 = vmax.f32 %v461, 0.0
    %v576 = vmax.f32 %v464, 0.0
    %v577 = vmax.f32 %v469, 0.0
    %v578 = vmax.f32 %v472, 0.0
    %v579 = vmax.f32 %v477, 0.0
    %v580 = vmax.f32 %v480, 0.0
    %v581 = vmax.f32 %v485, 0.0
    %v582 = vmax.f32 %v488, 0.0
    %v583 = vmax.f32 %v493, 0.0
    %v584 = vmax.f32 %v496, 0.0
    %v585 = vmax.f32 %v501, 0.0
    %v586 = vmax.f32 %v504, 0.0
    %v587 = vmax.f32 %v509, 0.0
    %v588 = vmax.f32 %v512, 0.0
    %v589 = vmax.f32 %v517, 0.0
    %v590 = vmax.f32 %v520, 0.0
    %v591 = vmax.f32 %v525, 0.0
    %v592 = vmax.f32 %v528, 0.0
    %v593 = vmax.f32 %v533, 0.0
    %v594 = vmax.f32 %v536, 0.0
    %v595 = vmax.f32 %v541, 0.0
    %v596 = vmax.f32 %v544, 0.0
    %v597 = vmax.f32 %v549, 0.0
    %v598 = vmax.f32 %v552, 0.0
    %v599 = vmax.f32 %v557, 0.0
    %v600 = vmax.f32 %v560, 0.0
    %v601 = vmax.f32 %v565, 0.0
    %v602 = vmax.f32 %v568, 0.0
    %v603 = vpack.c.bf16 %v572, %v571
    %v604 = vpack.c.bf16 %v574, %v573
    %v605 = vpack.c.bf16 %v576, %v575
    %v606 = vpack.c.bf16 %v578, %v577
    %v607 = vpack.c.bf16 %v580, %v579
    %v608 = vpack.c.bf16 %v582, %v581
    %v609 = vpack.c.bf16 %v584, %v583
    %v610 = vpack.c.bf16 %v586, %v585
    %v611 = vpack.c.bf16 %v588, %v587
    %v612 = vpack.c.bf16 %v590, %v589
    %v613 = vpack.c.bf16 %v592, %v591
    %v614 = vpack.c.bf16 %v594, %v593
    %v615 = vpack.c.bf16 %v596, %v595
    %v616 = vpack.c.bf16 %v598, %v597
    %v617 = vpack.c.bf16 %v600, %v599
    %v618 = vpack.c.bf16 %v602, %v601
    %v619 = vld [vmem:[%s5] sm:$0xff]
    %v620 = vld [vmem:[%s5 + $0x8] sm:$0xff]
    %v621 = vld [vmem:[%s5 + $0x10] sm:$0xff]
    %v622 = vld [vmem:[%s5 + $0x18] sm:$0xff]
    %v623 = vld [vmem:[%s5 + $0x20] sm:$0xff]
    %v624 = vld [vmem:[%s5 + $0x28] sm:$0xff]
    %v625 = vld [vmem:[%s5 + $0x30] sm:$0xff]
    %v626 = vld [vmem:[%s5 + $0x38] sm:$0xff]
    %v627 = vld [vmem:[%s5 + $0x40] sm:$0xff]
    %v628 = vld [vmem:[%s5 + $0x48] sm:$0xff]
    %v629 = vld [vmem:[%s5 + $0x50] sm:$0xff]
    %v630 = vld [vmem:[%s5 + $0x58] sm:$0xff]
    %v631 = vld [vmem:[%s5 + $0x60] sm:$0xff]
    %v632 = vld [vmem:[%s5 + $0x68] sm:$0xff]
    %v633 = vld [vmem:[%s5 + $0x70] sm:$0xff]
    %v634 = vld [vmem:[%s5 + $0x78] sm:$0xff]
    %v635 = vld [vmem:[%s5 + $0x80] sm:$0xff]
    %v636 = vld [vmem:[%s5 + $0x88] sm:$0xff]
    %v637 = vld [vmem:[%s5 + $0x90] sm:$0xff]
    %v638 = vld [vmem:[%s5 + $0x98] sm:$0xff]
    %v639 = vld [vmem:[%s5 + $0xa0] sm:$0xff]
    %v640 = vld [vmem:[%s5 + $0xa8] sm:$0xff]
    %v641 = vld [vmem:[%s5 + $0xb0] sm:$0xff]
    %v642 = vld [vmem:[%s5 + $0xb8] sm:$0xff]
    %v643 = vld [vmem:[%s5 + $0xc0] sm:$0xff]
    %v644 = vld [vmem:[%s5 + $0xc8] sm:$0xff]
    %v645 = vld [vmem:[%s5 + $0xd0] sm:$0xff]
    %v646 = vld [vmem:[%s5 + $0xd8] sm:$0xff]
    %v647 = vld [vmem:[%s5 + $0xe0] sm:$0xff]
    %v648 = vld [vmem:[%s5 + $0xe8] sm:$0xff]
    %v649 = vld [vmem:[%s5 + $0xf0] sm:$0xff]
    %v650 = vld [vmem:[%s5 + $0xf8] sm:$0xff]
    %v651 = vld [vmem:[%s5 + $0x100] sm:$0xff]
    %v652 = vld [vmem:[%s5 + $0x108] sm:$0xff]
    %v653 = vld [vmem:[%s5 + $0x110] sm:$0xff]
    %v654 = vld [vmem:[%s5 + $0x118] sm:$0xff]
    %v655 = vld [vmem:[%s5 + $0x120] sm:$0xff]
    %v656 = vld [vmem:[%s5 + $0x128] sm:$0xff]
    %v657 = vld [vmem:[%s5 + $0x130] sm:$0xff]
    %v658 = vld [vmem:[%s5 + $0x138] sm:$0xff]
    %v659 = vld [vmem:[%s5 + $0x140] sm:$0xff]
    %v660 = vld [vmem:[%s5 + $0x148] sm:$0xff]
    %v661 = vld [vmem:[%s5 + $0x150] sm:$0xff]
    %v662 = vld [vmem:[%s5 + $0x158] sm:$0xff]
    %v663 = vld [vmem:[%s5 + $0x160] sm:$0xff]
    %v664 = vld [vmem:[%s5 + $0x168] sm:$0xff]
    %v665 = vld [vmem:[%s5 + $0x170] sm:$0xff]
    %v666 = vld [vmem:[%s5 + $0x178] sm:$0xff]
    %v667 = vld [vmem:[%s5 + $0x180] sm:$0xff]
    %v668 = vld [vmem:[%s5 + $0x188] sm:$0xff]
    %v669 = vld [vmem:[%s5 + $0x190] sm:$0xff]
    %v670 = vld [vmem:[%s5 + $0x198] sm:$0xff]
    %v671 = vld [vmem:[%s5 + $0x1a0] sm:$0xff]
    %v672 = vld [vmem:[%s5 + $0x1a8] sm:$0xff]
    %v673 = vld [vmem:[%s5 + $0x1b0] sm:$0xff]
    %v674 = vld [vmem:[%s5 + $0x1b8] sm:$0xff]
    %v675 = vld [vmem:[%s5 + $0x1c0] sm:$0xff]
    %v676 = vld [vmem:[%s5 + $0x1c8] sm:$0xff]
    %v677 = vld [vmem:[%s5 + $0x1d0] sm:$0xff]
    %v678 = vld [vmem:[%s5 + $0x1d8] sm:$0xff]
    %v679 = vld [vmem:[%s5 + $0x1e0] sm:$0xff]
    %v680 = vld [vmem:[%s5 + $0x1e8] sm:$0xff]
    %v681 = vld [vmem:[%s5 + $0x1f0] sm:$0xff]
    %v682 = vld [vmem:[%s5 + $0x1f8] sm:$0xff]
    %v683 = vld [vmem:[%s6] sm:$0xff]
    %v684 = vld [vmem:[%s6 + $0x8] sm:$0xff]
    %v685 = vld [vmem:[%s6 + $0x10] sm:$0xff]
    %v686 = vld [vmem:[%s6 + $0x18] sm:$0xff]
    %v687 = vld [vmem:[%s6 + $0x20] sm:$0xff]
    %v688 = vld [vmem:[%s6 + $0x28] sm:$0xff]
    %v689 = vld [vmem:[%s6 + $0x30] sm:$0xff]
    %v690 = vld [vmem:[%s6 + $0x38] sm:$0xff]
    %v691 = vld [vmem:[%s6 + $0x40] sm:$0xff]
    %v692 = vld [vmem:[%s6 + $0x48] sm:$0xff]
    %v693 = vld [vmem:[%s6 + $0x50] sm:$0xff]
    %v694 = vld [vmem:[%s6 + $0x58] sm:$0xff]
    %v695 = vld [vmem:[%s6 + $0x60] sm:$0xff]
    %v696 = vld [vmem:[%s6 + $0x68] sm:$0xff]
    %v697 = vld [vmem:[%s6 + $0x70] sm:$0xff]
    %v698 = vld [vmem:[%s6 + $0x78] sm:$0xff]
    %v699 = vld [vmem:[%s6 + $0x80] sm:$0xff]
    %v700 = vld [vmem:[%s6 + $0x88] sm:$0xff]
    %v701 = vld [vmem:[%s6 + $0x90] sm:$0xff]
    %v702 = vld [vmem:[%s6 + $0x98] sm:$0xff]
    %v703 = vld [vmem:[%s6 + $0xa0] sm:$0xff]
    %v704 = vld [vmem:[%s6 + $0xa8] sm:$0xff]
    %v705 = vld [vmem:[%s6 + $0xb0] sm:$0xff]
    %v706 = vld [vmem:[%s6 + $0xb8] sm:$0xff]
    %v707 = vld [vmem:[%s6 + $0xc0] sm:$0xff]
    %v708 = vld [vmem:[%s6 + $0xc8] sm:$0xff]
    %v709 = vld [vmem:[%s6 + $0xd0] sm:$0xff]
    %v710 = vld [vmem:[%s6 + $0xd8] sm:$0xff]
    %v711 = vld [vmem:[%s6 + $0xe0] sm:$0xff]
    %v712 = vld [vmem:[%s6 + $0xe8] sm:$0xff]
    %v713 = vld [vmem:[%s6 + $0xf0] sm:$0xff]
    %v714 = vld [vmem:[%s6 + $0xf8] sm:$0xff]
    %v715 = vld [vmem:[%s6 + $0x100] sm:$0xff]
    %v716 = vld [vmem:[%s6 + $0x108] sm:$0xff]
    %v717 = vld [vmem:[%s6 + $0x110] sm:$0xff]
    %v718 = vld [vmem:[%s6 + $0x118] sm:$0xff]
    %v719 = vld [vmem:[%s6 + $0x120] sm:$0xff]
    %v720 = vld [vmem:[%s6 + $0x128] sm:$0xff]
    %v721 = vld [vmem:[%s6 + $0x130] sm:$0xff]
    %v722 = vld [vmem:[%s6 + $0x138] sm:$0xff]
    %v723 = vld [vmem:[%s6 + $0x140] sm:$0xff]
    %v724 = vld [vmem:[%s6 + $0x148] sm:$0xff]
    %v725 = vld [vmem:[%s6 + $0x150] sm:$0xff]
    %v726 = vld [vmem:[%s6 + $0x158] sm:$0xff]
    %v727 = vld [vmem:[%s6 + $0x160] sm:$0xff]
    %v728 = vld [vmem:[%s6 + $0x168] sm:$0xff]
    %v729 = vld [vmem:[%s6 + $0x170] sm:$0xff]
    %v730 = vld [vmem:[%s6 + $0x178] sm:$0xff]
    %v731 = vld [vmem:[%s6 + $0x180] sm:$0xff]
    %v732 = vld [vmem:[%s6 + $0x188] sm:$0xff]
    %v733 = vld [vmem:[%s6 + $0x190] sm:$0xff]
    %v734 = vld [vmem:[%s6 + $0x198] sm:$0xff]
    %v735 = vld [vmem:[%s6 + $0x1a0] sm:$0xff]
    %v736 = vld [vmem:[%s6 + $0x1a8] sm:$0xff]
    %v737 = vld [vmem:[%s6 + $0x1b0] sm:$0xff]
    %v738 = vld [vmem:[%s6 + $0x1b8] sm:$0xff]
    %v739 = vld [vmem:[%s6 + $0x1c0] sm:$0xff]
    %v740 = vld [vmem:[%s6 + $0x1c8] sm:$0xff]
    %v741 = vld [vmem:[%s6 + $0x1d0] sm:$0xff]
    %v742 = vld [vmem:[%s6 + $0x1d8] sm:$0xff]
    %v743 = vld [vmem:[%s6 + $0x1e0] sm:$0xff]
    %v744 = vld [vmem:[%s6 + $0x1e8] sm:$0xff]
    %v745 = vld [vmem:[%s6 + $0x1f0] sm:$0xff]
    %v746 = vld [vmem:[%s6 + $0x1f8] sm:$0xff]
    %748 = vset.pattern.permute.xlu0 0
    %749 = vperm.xlu0 %748, %v683
    %v750 = vpop.permute.xlu0 %749
    %753 = vset.pattern.permute.xlu0 0
    %754 = vperm.xlu0 %753, %v684
    %v755 = vpop.permute.xlu0 %754
    %758 = vset.pattern.permute.xlu0 0
    %759 = vperm.xlu0 %758, %v685
    %v760 = vpop.permute.xlu0 %759
    %763 = vset.pattern.permute.xlu0 0
    %764 = vperm.xlu0 %763, %v686
    %v765 = vpop.permute.xlu0 %764
    %768 = vset.pattern.permute.xlu0 0
    %769 = vperm.xlu0 %768, %v687
    %v770 = vpop.permute.xlu0 %769
    %773 = vset.pattern.permute.xlu0 0
    %774 = vperm.xlu0 %773, %v688
    %v775 = vpop.permute.xlu0 %774
    %778 = vset.pattern.permute.xlu0 0
    %779 = vperm.xlu0 %778, %v689
    %v780 = vpop.permute.xlu0 %779
    %783 = vset.pattern.permute.xlu0 0
    %784 = vperm.xlu0 %783, %v690
    %v785 = vpop.permute.xlu0 %784
    %788 = vset.pattern.permute.xlu0 0
    %789 = vperm.xlu0 %788, %v691
    %v790 = vpop.permute.xlu0 %789
    %793 = vset.pattern.permute.xlu0 0
    %794 = vperm.xlu0 %793, %v692
    %v795 = vpop.permute.xlu0 %794
    %798 = vset.pattern.permute.xlu0 0
    %799 = vperm.xlu0 %798, %v693
    %v800 = vpop.permute.xlu0 %799
    %803 = vset.pattern.permute.xlu0 0
    %804 = vperm.xlu0 %803, %v694
    %v805 = vpop.permute.xlu0 %804
    %808 = vset.pattern.permute.xlu0 0
    %809 = vperm.xlu0 %808, %v695
    %v810 = vpop.permute.xlu0 %809
    %813 = vset.pattern.permute.xlu0 0
    %814 = vperm.xlu0 %813, %v696
    %v815 = vpop.permute.xlu0 %814
    %818 = vset.pattern.permute.xlu0 0
    %819 = vperm.xlu0 %818, %v697
    %v820 = vpop.permute.xlu0 %819
    %823 = vset.pattern.permute.xlu0 0
    %824 = vperm.xlu0 %823, %v698
    %v825 = vpop.permute.xlu0 %824
    %828 = vset.pattern.permute.xlu0 0
    %829 = vperm.xlu0 %828, %v699
    %v830 = vpop.permute.xlu0 %829
    %833 = vset.pattern.permute.xlu0 0
    %834 = vperm.xlu0 %833, %v700
    %v835 = vpop.permute.xlu0 %834
    %838 = vset.pattern.permute.xlu0 0
    %839 = vperm.xlu0 %838, %v701
    %v840 = vpop.permute.xlu0 %839
    %843 = vset.pattern.permute.xlu0 0
    %844 = vperm.xlu0 %843, %v702
    %v845 = vpop.permute.xlu0 %844
    %848 = vset.pattern.permute.xlu0 0
    %849 = vperm.xlu0 %848, %v703
    %v850 = vpop.permute.xlu0 %849
    %853 = vset.pattern.permute.xlu0 0
    %854 = vperm.xlu0 %853, %v704
    %v855 = vpop.permute.xlu0 %854
    %858 = vset.pattern.permute.xlu0 0
    %859 = vperm.xlu0 %858, %v705
    %v860 = vpop.permute.xlu0 %859
    %863 = vset.pattern.permute.xlu0 0
    %864 = vperm.xlu0 %863, %v706
    %v865 = vpop.permute.xlu0 %864
    %868 = vset.pattern.permute.xlu0 0
    %869 = vperm.xlu0 %868, %v707
    %v870 = vpop.permute.xlu0 %869
    %873 = vset.pattern.permute.xlu0 0
    %874 = vperm.xlu0 %873, %v708
    %v875 = vpop.permute.xlu0 %874
    %878 = vset.pattern.permute.xlu0 0
    %879 = vperm.xlu0 %878, %v709
    %v880 = vpop.permute.xlu0 %879
    %883 = vset.pattern.permute.xlu0 0
    %884 = vperm.xlu0 %883, %v710
    %v885 = vpop.permute.xlu0 %884
    %888 = vset.pattern.permute.xlu0 0
    %889 = vperm.xlu0 %888, %v711
    %v890 = vpop.permute.xlu0 %889
    %893 = vset.pattern.permute.xlu0 0
    %894 = vperm.xlu0 %893, %v712
    %v895 = vpop.permute.xlu0 %894
    %898 = vset.pattern.permute.xlu0 0
    %899 = vperm.xlu0 %898, %v713
    %v900 = vpop.permute.xlu0 %899
    %903 = vset.pattern.permute.xlu0 0
    %904 = vperm.xlu0 %903, %v714
    %v905 = vpop.permute.xlu0 %904
    %908 = vset.pattern.permute.xlu0 0
    %909 = vperm.xlu0 %908, %v715
    %v910 = vpop.permute.xlu0 %909
    %913 = vset.pattern.permute.xlu0 0
    %914 = vperm.xlu0 %913, %v716
    %v915 = vpop.permute.xlu0 %914
    %918 = vset.pattern.permute.xlu0 0
    %919 = vperm.xlu0 %918, %v717
    %v920 = vpop.permute.xlu0 %919
    %923 = vset.pattern.permute.xlu0 0
    %924 = vperm.xlu0 %923, %v718
    %v925 = vpop.permute.xlu0 %924
    %928 = vset.pattern.permute.xlu0 0
    %929 = vperm.xlu0 %928, %v719
    %v930 = vpop.permute.xlu0 %929
    %933 = vset.pattern.permute.xlu0 0
    %934 = vperm.xlu0 %933, %v720
    %v935 = vpop.permute.xlu0 %934
    %938 = vset.pattern.permute.xlu0 0
    %939 = vperm.xlu0 %938, %v721
    %v940 = vpop.permute.xlu0 %939
    %943 = vset.pattern.permute.xlu0 0
    %944 = vperm.xlu0 %943, %v722
    %v945 = vpop.permute.xlu0 %944
    %948 = vset.pattern.permute.xlu0 0
    %949 = vperm.xlu0 %948, %v723
    %v950 = vpop.permute.xlu0 %949
    %953 = vset.pattern.permute.xlu0 0
    %954 = vperm.xlu0 %953, %v724
    %v955 = vpop.permute.xlu0 %954
    %958 = vset.pattern.permute.xlu0 0
    %959 = vperm.xlu0 %958, %v725
    %v960 = vpop.permute.xlu0 %959
    %963 = vset.pattern.permute.xlu0 0
    %964 = vperm.xlu0 %963, %v726
    %v965 = vpop.permute.xlu0 %964
    %968 = vset.pattern.permute.xlu0 0
    %969 = vperm.xlu0 %968, %v727
    %v970 = vpop.permute.xlu0 %969
    %973 = vset.pattern.permute.xlu0 0
    %974 = vperm.xlu0 %973, %v728
    %v975 = vpop.permute.xlu0 %974
    %978 = vset.pattern.permute.xlu0 0
    %979 = vperm.xlu0 %978, %v729
    %v980 = vpop.permute.xlu0 %979
    %983 = vset.pattern.permute.xlu0 0
    %984 = vperm.xlu0 %983, %v730
    %v985 = vpop.permute.xlu0 %984
    %988 = vset.pattern.permute.xlu0 0
    %989 = vperm.xlu0 %988, %v731
    %v990 = vpop.permute.xlu0 %989
    %993 = vset.pattern.permute.xlu0 0
    %994 = vperm.xlu0 %993, %v732
    %v995 = vpop.permute.xlu0 %994
    %998 = vset.pattern.permute.xlu0 0
    %999 = vperm.xlu0 %998, %v733
    %v1000 = vpop.permute.xlu0 %999
    %1003 = vset.pattern.permute.xlu0 0
    %1004 = vperm.xlu0 %1003, %v734
    %v1005 = vpop.permute.xlu0 %1004
    %1008 = vset.pattern.permute.xlu0 0
    %1009 = vperm.xlu0 %1008, %v735
    %v1010 = vpop.permute.xlu0 %1009
    %1013 = vset.pattern.permute.xlu0 0
    %1014 = vperm.xlu0 %1013, %v736
    %v1015 = vpop.permute.xlu0 %1014
    %1018 = vset.pattern.permute.xlu0 0
    %1019 = vperm.xlu0 %1018, %v737
    %v1020 = vpop.permute.xlu0 %1019
    %1023 = vset.pattern.permute.xlu0 0
    %1024 = vperm.xlu0 %1023, %v738
    %v1025 = vpop.permute.xlu0 %1024
    %1028 = vset.pattern.permute.xlu0 0
    %1029 = vperm.xlu0 %1028, %v739
    %v1030 = vpop.permute.xlu0 %1029
    %1033 = vset.pattern.permute.xlu0 0
    %1034 = vperm.xlu0 %1033, %v740
    %v1035 = vpop.permute.xlu0 %1034
    %1038 = vset.pattern.permute.xlu0 0
    %1039 = vperm.xlu0 %1038, %v741
    %v1040 = vpop.permute.xlu0 %1039
    %1043 = vset.pattern.permute.xlu0 0
    %1044 = vperm.xlu0 %1043, %v742
    %v1045 = vpop.permute.xlu0 %1044
    %1048 = vset.pattern.permute.xlu0 0
    %1049 = vperm.xlu0 %1048, %v743
    %v1050 = vpop.permute.xlu0 %1049
    %1053 = vset.pattern.permute.xlu0 0
    %1054 = vperm.xlu0 %1053, %v744
    %v1055 = vpop.permute.xlu0 %1054
    %1058 = vset.pattern.permute.xlu0 0
    %1059 = vperm.xlu0 %1058, %v745
    %v1060 = vpop.permute.xlu0 %1059
    %1063 = vset.pattern.permute.xlu0 0
    %1064 = vperm.xlu0 %1063, %v746
    %v1065 = vpop.permute.xlu0 %1064
    %v1131 = vunpack.c.l.b16 %v619
    %v1132 = vunpack.c.h.b16 %v619
    %v1133 = vunpack.c.l.b16 %v620
    %v1134 = vunpack.c.h.b16 %v620
    %v1135 = vunpack.c.l.b16 %v621
    %v1136 = vunpack.c.h.b16 %v621
    %v1137 = vunpack.c.l.b16 %v622
    %v1138 = vunpack.c.h.b16 %v622
    %v1139 = vunpack.c.l.b16 %v623
    %v1140 = vunpack.c.h.b16 %v623
    %v1141 = vunpack.c.l.b16 %v624
    %v1142 = vunpack.c.h.b16 %v624
    %v1143 = vunpack.c.l.b16 %v625
    %v1144 = vunpack.c.h.b16 %v625
    %v1145 = vunpack.c.l.b16 %v626
    %v1146 = vunpack.c.h.b16 %v626
    %v1147 = vunpack.c.l.b16 %v627
    %v1148 = vunpack.c.h.b16 %v627
    %v1149 = vunpack.c.l.b16 %v628
    %v1150 = vunpack.c.h.b16 %v628
    %v1151 = vunpack.c.l.b16 %v629
    %v1152 = vunpack.c.h.b16 %v629
    %v1153 = vunpack.c.l.b16 %v630
    %v1154 = vunpack.c.h.b16 %v630
    %v1155 = vunpack.c.l.b16 %v631
    %v1156 = vunpack.c.h.b16 %v631
    %v1157 = vunpack.c.l.b16 %v632
    %v1158 = vunpack.c.h.b16 %v632
    %v1159 = vunpack.c.l.b16 %v633
    %v1160 = vunpack.c.h.b16 %v633
    %v1161 = vunpack.c.l.b16 %v634
    %v1162 = vunpack.c.h.b16 %v634
    %v1163 = vunpack.c.l.b16 %v635
    %v1164 = vunpack.c.h.b16 %v635
    %v1165 = vunpack.c.l.b16 %v636
    %v1166 = vunpack.c.h.b16 %v636
    %v1167 = vunpack.c.l.b16 %v637
    %v1168 = vunpack.c.h.b16 %v637
    %v1169 = vunpack.c.l.b16 %v638
    %v1170 = vunpack.c.h.b16 %v638
    %v1171 = vunpack.c.l.b16 %v639
    %v1172 = vunpack.c.h.b16 %v639
    %v1173 = vunpack.c.l.b16 %v640
    %v1174 = vunpack.c.h.b16 %v640
    %v1175 = vunpack.c.l.b16 %v641
    %v1176 = vunpack.c.h.b16 %v641
    %v1177 = vunpack.c.l.b16 %v642
    %v1178 = vunpack.c.h.b16 %v642
    %v1179 = vunpack.c.l.b16 %v643
    %v1180 = vunpack.c.h.b16 %v643
    %v1181 = vunpack.c.l.b16 %v644
    %v1182 = vunpack.c.h.b16 %v644
    %v1183 = vunpack.c.l.b16 %v645
    %v1184 = vunpack.c.h.b16 %v645
    %v1185 = vunpack.c.l.b16 %v646
    %v1186 = vunpack.c.h.b16 %v646
    %v1187 = vunpack.c.l.b16 %v647
    %v1188 = vunpack.c.h.b16 %v647
    %v1189 = vunpack.c.l.b16 %v648
    %v1190 = vunpack.c.h.b16 %v648
    %v1191 = vunpack.c.l.b16 %v649
    %v1192 = vunpack.c.h.b16 %v649
    %v1193 = vunpack.c.l.b16 %v650
    %v1194 = vunpack.c.h.b16 %v650
    %v1195 = vunpack.c.l.b16 %v651
    %v1196 = vunpack.c.h.b16 %v651
    %v1197 = vunpack.c.l.b16 %v652
    %v1198 = vunpack.c.h.b16 %v652
    %v1199 = vunpack.c.l.b16 %v653
    %v1200 = vunpack.c.h.b16 %v653
    %v1201 = vunpack.c.l.b16 %v654
    %v1202 = vunpack.c.h.b16 %v654
    %v1203 = vunpack.c.l.b16 %v655
    %v1204 = vunpack.c.h.b16 %v655
    %v1205 = vunpack.c.l.b16 %v656
    %v1206 = vunpack.c.h.b16 %v656
    %v1207 = vunpack.c.l.b16 %v657
    %v1208 = vunpack.c.h.b16 %v657
    %v1209 = vunpack.c.l.b16 %v658
    %v1210 = vunpack.c.h.b16 %v658
    %v1211 = vunpack.c.l.b16 %v659
    %v1212 = vunpack.c.h.b16 %v659
    %v1213 = vunpack.c.l.b16 %v660
    %v1214 = vunpack.c.h.b16 %v660
    %v1215 = vunpack.c.l.b16 %v661
    %v1216 = vunpack.c.h.b16 %v661
    %v1217 = vunpack.c.l.b16 %v662
    %v1218 = vunpack.c.h.b16 %v662
    %v1219 = vunpack.c.l.b16 %v663
    %v1220 = vunpack.c.h.b16 %v663
    %v1221 = vunpack.c.l.b16 %v664
    %v1222 = vunpack.c.h.b16 %v664
    %v1223 = vunpack.c.l.b16 %v665
    %v1224 = vunpack.c.h.b16 %v665
    %v1225 = vunpack.c.l.b16 %v666
    %v1226 = vunpack.c.h.b16 %v666
    %v1227 = vunpack.c.l.b16 %v667
    %v1228 = vunpack.c.h.b16 %v667
    %v1229 = vunpack.c.l.b16 %v668
    %v1230 = vunpack.c.h.b16 %v668
    %v1231 = vunpack.c.l.b16 %v669
    %v1232 = vunpack.c.h.b16 %v669
    %v1233 = vunpack.c.l.b16 %v670
    %v1234 = vunpack.c.h.b16 %v670
    %v1235 = vunpack.c.l.b16 %v671
    %v1236 = vunpack.c.h.b16 %v671
    %v1237 = vunpack.c.l.b16 %v672
    %v1238 = vunpack.c.h.b16 %v672
    %v1239 = vunpack.c.l.b16 %v673
    %v1240 = vunpack.c.h.b16 %v673
    %v1241 = vunpack.c.l.b16 %v674
    %v1242 = vunpack.c.h.b16 %v674
    %v1243 = vunpack.c.l.b16 %v675
    %v1244 = vunpack.c.h.b16 %v675
    %v1245 = vunpack.c.l.b16 %v676
    %v1246 = vunpack.c.h.b16 %v676
    %v1247 = vunpack.c.l.b16 %v677
    %v1248 = vunpack.c.h.b16 %v677
    %v1249 = vunpack.c.l.b16 %v678
    %v1250 = vunpack.c.h.b16 %v678
    %v1251 = vunpack.c.l.b16 %v679
    %v1252 = vunpack.c.h.b16 %v679
    %v1253 = vunpack.c.l.b16 %v680
    %v1254 = vunpack.c.h.b16 %v680
    %v1255 = vunpack.c.l.b16 %v681
    %v1256 = vunpack.c.h.b16 %v681
    %v1257 = vunpack.c.l.b16 %v682
    %v1258 = vunpack.c.h.b16 %v682
    %v1259 = vpack.c.b16 %v1133, %v1131
    %v1260 = vpack.c.b16 %v1134, %v1132
    %v1261 = vpack.c.b16 %v1137, %v1135
    %v1262 = vpack.c.b16 %v1138, %v1136
    %v1263 = vpack.c.b16 %v1141, %v1139
    %v1264 = vpack.c.b16 %v1142, %v1140
    %v1265 = vpack.c.b16 %v1145, %v1143
    %v1266 = vpack.c.b16 %v1146, %v1144
    %v1267 = vpack.c.b16 %v1149, %v1147
    %v1268 = vpack.c.b16 %v1150, %v1148
    %v1269 = vpack.c.b16 %v1153, %v1151
    %v1270 = vpack.c.b16 %v1154, %v1152
    %v1271 = vpack.c.b16 %v1157, %v1155
    %v1272 = vpack.c.b16 %v1158, %v1156
    %v1273 = vpack.c.b16 %v1161, %v1159
    %v1274 = vpack.c.b16 %v1162, %v1160
    %v1275 = vpack.c.b16 %v1165, %v1163
    %v1276 = vpack.c.b16 %v1166, %v1164
    %v1277 = vpack.c.b16 %v1169, %v1167
    %v1278 = vpack.c.b16 %v1170, %v1168
    %v1279 = vpack.c.b16 %v1173, %v1171
    %v1280 = vpack.c.b16 %v1174, %v1172
    %v1281 = vpack.c.b16 %v1177, %v1175
    %v1282 = vpack.c.b16 %v1178, %v1176
    %v1283 = vpack.c.b16 %v1181, %v1179
    %v1284 = vpack.c.b16 %v1182, %v1180
    %v1285 = vpack.c.b16 %v1185, %v1183
    %v1286 = vpack.c.b16 %v1186, %v1184
    %v1287 = vpack.c.b16 %v1189, %v1187
    %v1288 = vpack.c.b16 %v1190, %v1188
    %v1289 = vpack.c.b16 %v1193, %v1191
    %v1290 = vpack.c.b16 %v1194, %v1192
    %v1291 = vpack.c.b16 %v1197, %v1195
    %v1292 = vpack.c.b16 %v1198, %v1196
    %v1293 = vpack.c.b16 %v1201, %v1199
    %v1294 = vpack.c.b16 %v1202, %v1200
    %v1295 = vpack.c.b16 %v1205, %v1203
    %v1296 = vpack.c.b16 %v1206, %v1204
    %v1297 = vpack.c.b16 %v1209, %v1207
    %v1298 = vpack.c.b16 %v1210, %v1208
    %v1299 = vpack.c.b16 %v1213, %v1211
    %v1300 = vpack.c.b16 %v1214, %v1212
    %v1301 = vpack.c.b16 %v1217, %v1215
    %v1302 = vpack.c.b16 %v1218, %v1216
    %v1303 = vpack.c.b16 %v1221, %v1219
    %v1304 = vpack.c.b16 %v1222, %v1220
    %v1305 = vpack.c.b16 %v1225, %v1223
    %v1306 = vpack.c.b16 %v1226, %v1224
    %v1307 = vpack.c.b16 %v1229, %v1227
    %v1308 = vpack.c.b16 %v1230, %v1228
    %v1309 = vpack.c.b16 %v1233, %v1231
    %v1310 = vpack.c.b16 %v1234, %v1232
    %v1311 = vpack.c.b16 %v1237, %v1235
    %v1312 = vpack.c.b16 %v1238, %v1236
    %v1313 = vpack.c.b16 %v1241, %v1239
    %v1314 = vpack.c.b16 %v1242, %v1240
    %v1315 = vpack.c.b16 %v1245, %v1243
    %v1316 = vpack.c.b16 %v1246, %v1244
    %v1317 = vpack.c.b16 %v1249, %v1247
    %v1318 = vpack.c.b16 %v1250, %v1248
    %v1319 = vpack.c.b16 %v1253, %v1251
    %v1320 = vpack.c.b16 %v1254, %v1252
    %v1321 = vpack.c.b16 %v1257, %v1255
    %v1322 = vpack.c.b16 %v1258, %v1256
    %1387 = vmatprep.subr.bf16.mxu0 0
    %1388 = vmatpush1.bf16.msra.mxu0 %v603
    %1389 = vmatprep.subr.bf16.mxu0 0
    %1390 = vmatpush1.bf16.msra.mxu0 %v604
    %1391 = vmatprep.subr.bf16.mxu0 0
    %1392 = vmatpush1.bf16.msra.mxu0 %v605
    %1393 = vmatprep.subr.bf16.mxu0 0
    %1394 = vmatpush1.bf16.msra.mxu0 %v606
    %1395 = vmatprep.subr.bf16.mxu0 0
    %1396 = vmatpush1.bf16.msra.mxu0 %v607
    %1397 = vmatprep.subr.bf16.mxu0 0
    %1398 = vmatpush1.bf16.msra.mxu0 %v608
    %1399 = vmatprep.subr.bf16.mxu0 0
    %1400 = vmatpush1.bf16.msra.mxu0 %v609
    %1401 = vmatprep.subr.bf16.mxu0 0
    %1402 = vmatpush1.bf16.msra.mxu0 %v610
    %1403 = vmatprep.subr.bf16.mxu0 0
    %1404 = vmatpush1.bf16.msra.mxu0 %v611
    %1405 = vmatprep.subr.bf16.mxu0 0
    %1406 = vmatpush1.bf16.msra.mxu0 %v612
    %1407 = vmatprep.subr.bf16.mxu0 0
    %1408 = vmatpush1.bf16.msra.mxu0 %v613
    %1409 = vmatprep.subr.bf16.mxu0 0
    %1410 = vmatpush1.bf16.msra.mxu0 %v614
    %1411 = vmatprep.subr.bf16.mxu0 0
    %1412 = vmatpush1.bf16.msra.mxu0 %v615
    %1413 = vmatprep.subr.bf16.mxu0 0
    %1414 = vmatpush1.bf16.msra.mxu0 %v616
    %1415 = vmatprep.subr.bf16.mxu0 0
    %1416 = vmatpush1.bf16.msra.mxu0 %v617
    %1417 = vmatprep.subr.bf16.mxu0 0
    %1418 = vmatpush1.bf16.msra.mxu0 %v618
    %1419 = vmatprep.mubr.bf16.mxu0 %v1260
    %1420 = vmatmul.mubr.bf16.gmra.mrb[0].mxu0 %v1259
    %v1421 = vpop.f32.mrb[0].mxu0
    %v1422 = vadd.f32 %v750, %v1421
    %v1423 = vpop.f32.mrb[0].mxu0
    %v1424 = vpop.f32.mrb[0].mxu0
    %v1425 = vadd.f32 %v755, %v1424
    %v1426 = vpop.f32.mrb[0].mxu0
    %1427 = vmatprep.mubr.bf16.mxu0 %v1262
    %1428 = vmatmul.mubr.bf16.gmra.mrb[0].mxu0 %v1261
    %v1429 = vpop.f32.mrb[0].mxu0
    %v1430 = vadd.f32 %v760, %v1429
    %v1431 = vpop.f32.mrb[0].mxu0
    %v1432 = vpop.f32.mrb[0].mxu0
    %v1433 = vadd.f32 %v765, %v1432
    %v1434 = vpop.f32.mrb[0].mxu0
    %1435 = vmatprep.mubr.bf16.mxu0 %v1264
    %1436 = vmatmul.mubr.bf16.gmra.mrb[0].mxu0 %v1263
    %v1437 = vpop.f32.mrb[0].mxu0
    %v1438 = vadd.f32 %v770, %v1437
    %v1439 = vpop.f32.mrb[0].mxu0
    %v1440 = vpop.f32.mrb[0].mxu0
    %v1441 = vadd.f32 %v775, %v1440
    %v1442 = vpop.f32.mrb[0].mxu0
    %1443 = vmatprep.mubr.bf16.mxu0 %v1266
    %1444 = vmatmul.mubr.bf16.gmra.mrb[0].mxu0 %v1265
    %v1445 = vpop.f32.mrb[0].mxu0
    %v1446 = vadd.f32 %v780, %v1445
    %v1447 = vpop.f32.mrb[0].mxu0
    %v1448 = vpop.f32.mrb[0].mxu0
    %v1449 = vadd.f32 %v785, %v1448
    %v1450 = vpop.f32.mrb[0].mxu0
    %1451 = vmatprep.mubr.bf16.mxu0 %v1268
    %1452 = vmatmul.mubr.bf16.gmra.mrb[0].mxu0 %v1267
    %v1453 = vpop.f32.mrb[0].mxu0
    %v1454 = vadd.f32 %v790, %v1453
    %v1455 = vpop.f32.mrb[0].mxu0
    %v1456 = vpop.f32.mrb[0].mxu0
    %v1457 = vadd.f32 %v795, %v1456
    %v1458 = vpop.f32.mrb[0].mxu0
    %1459 = vmatprep.mubr.bf16.mxu0 %v1270
    %1460 = vmatmul.mubr.bf16.gmra.mrb[0].mxu0 %v1269
    %v1461 = vpop.f32.mrb[0].mxu0
    %v1462 = vadd.f32 %v800, %v1461
    %v1463 = vpop.f32.mrb[0].mxu0
    %v1464 = vpop.f32.mrb[0].mxu0
    %v1465 = vadd.f32 %v805, %v1464
    %v1466 = vpop.f32.mrb[0].mxu0
    %1467 = vmatprep.mubr.bf16.mxu0 %v1272
    %1468 = vmatmul.mubr.bf16.gmra.mrb[0].mxu0 %v1271
    %v1469 = vpop.f32.mrb[0].mxu0
    %v1470 = vadd.f32 %v810, %v1469
    %v1471 = vpop.f32.mrb[0].mxu0
    %v1472 = vpop.f32.mrb[0].mxu0
    %v1473 = vadd.f32 %v815, %v1472
    %v1474 = vpop.f32.mrb[0].mxu0
    %1475 = vmatprep.mubr.bf16.mxu0 %v1274
    %1476 = vmatmul.mubr.bf16.gmra.mrb[0].mxu0 %v1273
    %v1477 = vpop.f32.mrb[0].mxu0
    %v1478 = vadd.f32 %v820, %v1477
    %v1479 = vpop.f32.mrb[0].mxu0
    %v1480 = vpop.f32.mrb[0].mxu0
    %v1481 = vadd.f32 %v825, %v1480
    %v1482 = vpop.f32.mrb[0].mxu0
    %1483 = vmatprep.mubr.bf16.mxu0 %v1276
    %1484 = vmatmul.mubr.bf16.gmra.mrb[0].mxu0 %v1275
    %v1485 = vpop.f32.mrb[0].mxu0
    %v1486 = vadd.f32 %v830, %v1485
    %v1487 = vpop.f32.mrb[0].mxu0
    %v1488 = vpop.f32.mrb[0].mxu0
    %v1489 = vadd.f32 %v835, %v1488
    %v1490 = vpop.f32.mrb[0].mxu0
    %1491 = vmatprep.mubr.bf16.mxu0 %v1278
    %1492 = vmatmul.mubr.bf16.gmra.mrb[0].mxu0 %v1277
    %v1493 = vpop.f32.mrb[0].mxu0
    %v1494 = vadd.f32 %v840, %v1493
    %v1495 = vpop.f32.mrb[0].mxu0
    %v1496 = vpop.f32.mrb[0].mxu0
    %v1497 = vadd.f32 %v845, %v1496
    %v1498 = vpop.f32.mrb[0].mxu0
    %1499 = vmatprep.mubr.bf16.mxu0 %v1280
    %1500 = vmatmul.mubr.bf16.gmra.mrb[0].mxu0 %v1279
    %v1501 = vpop.f32.mrb[0].mxu0
    %v1502 = vadd.f32 %v850, %v1501
    %v1503 = vpop.f32.mrb[0].mxu0
    %v1504 = vpop.f32.mrb[0].mxu0
    %v1505 = vadd.f32 %v855, %v1504
    %v1506 = vpop.f32.mrb[0].mxu0
    %1507 = vmatprep.mubr.bf16.mxu0 %v1282
    %1508 = vmatmul.mubr.bf16.gmra.mrb[0].mxu0 %v1281
    %v1509 = vpop.f32.mrb[0].mxu0
    %v1510 = vadd.f32 %v860, %v1509
    %v1511 = vpop.f32.mrb[0].mxu0
    %v1512 = vpop.f32.mrb[0].mxu0
    %v1513 = vadd.f32 %v865, %v1512
    %v1514 = vpop.f32.mrb[0].mxu0
    %1515 = vmatprep.mubr.bf16.mxu0 %v1284
    %1516 = vmatmul.mubr.bf16.gmra.mrb[0].mxu0 %v1283
    %v1517 = vpop.f32.mrb[0].mxu0
    %v1518 = vadd.f32 %v870, %v1517
    %v1519 = vpop.f32.mrb[0].mxu0
    %v1520 = vpop.f32.mrb[0].mxu0
    %v1521 = vadd.f32 %v875, %v1520
    %v1522 = vpop.f32.mrb[0].mxu0
    %1523 = vmatprep.mubr.bf16.mxu0 %v1286
    %1524 = vmatmul.mubr.bf16.gmra.mrb[0].mxu0 %v1285
    %v1525 = vpop.f32.mrb[0].mxu0
    %v1526 = vadd.f32 %v880, %v1525
    %v1527 = vpop.f32.mrb[0].mxu0
    %v1528 = vpop.f32.mrb[0].mxu0
    %v1529 = vadd.f32 %v885, %v1528
    %v1530 = vpop.f32.mrb[0].mxu0
    %1531 = vmatprep.mubr.bf16.mxu0 %v1288
    %1532 = vmatmul.mubr.bf16.gmra.mrb[0].mxu0 %v1287
    %v1533 = vpop.f32.mrb[0].mxu0
    %v1534 = vadd.f32 %v890, %v1533
    %v1535 = vpop.f32.mrb[0].mxu0
    %v1536 = vpop.f32.mrb[0].mxu0
    %v1537 = vadd.f32 %v895, %v1536
    %v1538 = vpop.f32.mrb[0].mxu0
    %1539 = vmatprep.mubr.bf16.mxu0 %v1290
    %1540 = vmatmul.mubr.bf16.gmra.mrb[0].mxu0 %v1289
    %v1541 = vpop.f32.mrb[0].mxu0
    %v1542 = vadd.f32 %v900, %v1541
    %v1543 = vpop.f32.mrb[0].mxu0
    %v1544 = vpop.f32.mrb[0].mxu0
    %v1545 = vadd.f32 %v905, %v1544
    %v1546 = vpop.f32.mrb[0].mxu0
    %1547 = vmatprep.mubr.bf16.mxu0 %v1292
    %1548 = vmatmul.mubr.bf16.gmra.mrb[0].mxu0 %v1291
    %v1549 = vpop.f32.mrb[0].mxu0
    %v1550 = vadd.f32 %v910, %v1549
    %v1551 = vpop.f32.mrb[0].mxu0
    %v1552 = vpop.f32.mrb[0].mxu0
    %v1553 = vadd.f32 %v915, %v1552
    %v1554 = vpop.f32.mrb[0].mxu0
    %1555 = vmatprep.mubr.bf16.mxu0 %v1294
    %1556 = vmatmul.mubr.bf16.gmra.mrb[0].mxu0 %v1293
    %v1557 = vpop.f32.mrb[0].mxu0
    %v1558 = vadd.f32 %v920, %v1557
    %v1559 = vpop.f32.mrb[0].mxu0
    %v1560 = vpop.f32.mrb[0].mxu0
    %v1561 = vadd.f32 %v925, %v1560
    %v1562 = vpop.f32.mrb[0].mxu0
    %1563 = vmatprep.mubr.bf16.mxu0 %v1296
    %1564 = vmatmul.mubr.bf16.gmra.mrb[0].mxu0 %v1295
    %v1565 = vpop.f32.mrb[0].mxu0
    %v1566 = vadd.f32 %v930, %v1565
    %v1567 = vpop.f32.mrb[0].mxu0
    %v1568 = vpop.f32.mrb[0].mxu0
    %v1569 = vadd.f32 %v935, %v1568
    %v1570 = vpop.f32.mrb[0].mxu0
    %1571 = vmatprep.mubr.bf16.mxu0 %v1298
    %1572 = vmatmul.mubr.bf16.gmra.mrb[0].mxu0 %v1297
    %v1573 = vpop.f32.mrb[0].mxu0
    %v1574 = vadd.f32 %v940, %v1573
    %v1575 = vpop.f32.mrb[0].mxu0
    %v1576 = vpop.f32.mrb[0].mxu0
    %v1577 = vadd.f32 %v945, %v1576
    %v1578 = vpop.f32.mrb[0].mxu0
    %1579 = vmatprep.mubr.bf16.mxu0 %v1300
    %1580 = vmatmul.mubr.bf16.gmra.mrb[0].mxu0 %v1299
    %v1581 = vpop.f32.mrb[0].mxu0
    %v1582 = vadd.f32 %v950, %v1581
    %v1583 = vpop.f32.mrb[0].mxu0
    %v1584 = vpop.f32.mrb[0].mxu0
    %v1585 = vadd.f32 %v955, %v1584
    %v1586 = vpop.f32.mrb[0].mxu0
    %1587 = vmatprep.mubr.bf16.mxu0 %v1302
    %1588 = vmatmul.mubr.bf16.gmra.mrb[0].mxu0 %v1301
    %v1589 = vpop.f32.mrb[0].mxu0
    %v1590 = vadd.f32 %v960, %v1589
    %v1591 = vpop.f32.mrb[0].mxu0
    %v1592 = vpop.f32.mrb[0].mxu0
    %v1593 = vadd.f32 %v965, %v1592
    %v1594 = vpop.f32.mrb[0].mxu0
    %1595 = vmatprep.mubr.bf16.mxu0 %v1304
    %1596 = vmatmul.mubr.bf16.gmra.mrb[0].mxu0 %v1303
    %v1597 = vpop.f32.mrb[0].mxu0
    %v1598 = vadd.f32 %v970, %v1597
    %v1599 = vpop.f32.mrb[0].mxu0
    %v1600 = vpop.f32.mrb[0].mxu0
    %v1601 = vadd.f32 %v975, %v1600
    %v1602 = vpop.f32.mrb[0].mxu0
    %1603 = vmatprep.mubr.bf16.mxu0 %v1306
    %1604 = vmatmul.mubr.bf16.gmra.mrb[0].mxu0 %v1305
    %v1605 = vpop.f32.mrb[0].mxu0
    %v1606 = vadd.f32 %v980, %v1605
    %v1607 = vpop.f32.mrb[0].mxu0
    %v1608 = vpop.f32.mrb[0].mxu0
    %v1609 = vadd.f32 %v985, %v1608
    %v1610 = vpop.f32.mrb[0].mxu0
    %1611 = vmatprep.mubr.bf16.mxu0 %v1308
    %1612 = vmatmul.mubr.bf16.gmra.mrb[0].mxu0 %v1307
    %v1613 = vpop.f32.mrb[0].mxu0
    %v1614 = vadd.f32 %v990, %v1613
    %v1615 = vpop.f32.mrb[0].mxu0
    %v1616 = vpop.f32.mrb[0].mxu0
    %v1617 = vadd.f32 %v995, %v1616
    %v1618 = vpop.f32.mrb[0].mxu0
    %1619 = vmatprep.mubr.bf16.mxu0 %v1310
    %1620 = vmatmul.mubr.bf16.gmra.mrb[0].mxu0 %v1309
    %v1621 = vpop.f32.mrb[0].mxu0
    %v1622 = vadd.f32 %v1000, %v1621
    %v1623 = vpop.f32.mrb[0].mxu0
    %v1624 = vpop.f32.mrb[0].mxu0
    %v1625 = vadd.f32 %v1005, %v1624
    %v1626 = vpop.f32.mrb[0].mxu0
    %1627 = vmatprep.mubr.bf16.mxu0 %v1312
    %1628 = vmatmul.mubr.bf16.gmra.mrb[0].mxu0 %v1311
    %v1629 = vpop.f32.mrb[0].mxu0
    %v1630 = vadd.f32 %v1010, %v1629
    %v1631 = vpop.f32.mrb[0].mxu0
    %v1632 = vpop.f32.mrb[0].mxu0
    %v1633 = vadd.f32 %v1015, %v1632
    %v1634 = vpop.f32.mrb[0].mxu0
    %1635 = vmatprep.mubr.bf16.mxu0 %v1314
    %1636 = vmatmul.mubr.bf16.gmra.mrb[0].mxu0 %v1313
    %v1637 = vpop.f32.mrb[0].mxu0
    %v1638 = vadd.f32 %v1020, %v1637
    %v1639 = vpop.f32.mrb[0].mxu0
    %v1640 = vpop.f32.mrb[0].mxu0
    %v1641 = vadd.f32 %v1025, %v1640
    %v1642 = vpop.f32.mrb[0].mxu0
    %1643 = vmatprep.mubr.bf16.mxu0 %v1316
    %1644 = vmatmul.mubr.bf16.gmra.mrb[0].mxu0 %v1315
    %v1645 = vpop.f32.mrb[0].mxu0
    %v1646 = vadd.f32 %v1030, %v1645
    %v1647 = vpop.f32.mrb[0].mxu0
    %v1648 = vpop.f32.mrb[0].mxu0
    %v1649 = vadd.f32 %v1035, %v1648
    %v1650 = vpop.f32.mrb[0].mxu0
    %1651 = vmatprep.mubr.bf16.mxu0 %v1318
    %1652 = vmatmul.mubr.bf16.gmra.mrb[0].mxu0 %v1317
    %v1653 = vpop.f32.mrb[0].mxu0
    %v1654 = vadd.f32 %v1040, %v1653
    %v1655 = vpop.f32.mrb[0].mxu0
    %v1656 = vpop.f32.mrb[0].mxu0
    %v1657 = vadd.f32 %v1045, %v1656
    %v1658 = vpop.f32.mrb[0].mxu0
    %1659 = vmatprep.mubr.bf16.mxu0 %v1320
    %1660 = vmatmul.mubr.bf16.gmra.mrb[0].mxu0 %v1319
    %v1661 = vpop.f32.mrb[0].mxu0
    %v1662 = vadd.f32 %v1050, %v1661
    %v1663 = vpop.f32.mrb[0].mxu0
    %v1664 = vpop.f32.mrb[0].mxu0
    %v1665 = vadd.f32 %v1055, %v1664
    %v1666 = vpop.f32.mrb[0].mxu0
    %1667 = vmatprep.mubr.bf16.mxu0 %v1322
    %1668 = vmatmul.mubr.bf16.gmra.mrb[0].mxu0 %v1321
    %v1669 = vpop.f32.mrb[0].mxu0
    %v1670 = vadd.f32 %v1060, %v1669
    %v1671 = vpop.f32.mrb[0].mxu0
    %v1672 = vpop.f32.mrb[0].mxu0
    %v1673 = vadd.f32 %v1065, %v1672
    %v1674 = vpop.f32.mrb[0].mxu0
    %1675 = vdwg.mxu0
    %v1676 = vmax.f32 %v1422, 0.0
    %v1677 = vmax.f32 %v1425, 0.0
    %v1678 = vmax.f32 %v1430, 0.0
    %v1679 = vmax.f32 %v1433, 0.0
    %v1680 = vmax.f32 %v1438, 0.0
    %v1681 = vmax.f32 %v1441, 0.0
    %v1682 = vmax.f32 %v1446, 0.0
    %v1683 = vmax.f32 %v1449, 0.0
    %v1684 = vmax.f32 %v1454, 0.0
    %v1685 = vmax.f32 %v1457, 0.0
    %v1686 = vmax.f32 %v1462, 0.0
    %v1687 = vmax.f32 %v1465, 0.0
    %v1688 = vmax.f32 %v1470, 0.0
    %v1689 = vmax.f32 %v1473, 0.0
    %v1690 = vmax.f32 %v1478, 0.0
    %v1691 = vmax.f32 %v1481, 0.0
    %v1692 = vmax.f32 %v1486, 0.0
    %v1693 = vmax.f32 %v1489, 0.0
    %v1694 = vmax.f32 %v1494, 0.0
    %v1695 = vmax.f32 %v1497, 0.0
    %v1696 = vmax.f32 %v1502, 0.0
    %v1697 = vmax.f32 %v1505, 0.0
    %v1698 = vmax.f32 %v1510, 0.0
    %v1699 = vmax.f32 %v1513, 0.0
    %v1700 = vmax.f32 %v1518, 0.0
    %v1701 = vmax.f32 %v1521, 0.0
    %v1702 = vmax.f32 %v1526, 0.0
    %v1703 = vmax.f32 %v1529, 0.0
    %v1704 = vmax.f32 %v1534, 0.0
    %v1705 = vmax.f32 %v1537, 0.0
    %v1706 = vmax.f32 %v1542, 0.0
    %v1707 = vmax.f32 %v1545, 0.0
    %v1708 = vmax.f32 %v1550, 0.0
    %v1709 = vmax.f32 %v1553, 0.0
    %v1710 = vmax.f32 %v1558, 0.0
    %v1711 = vmax.f32 %v1561, 0.0
    %v1712 = vmax.f32 %v1566, 0.0
    %v1713 = vmax.f32 %v1569, 0.0
    %v1714 = vmax.f32 %v1574, 0.0
    %v1715 = vmax.f32 %v1577, 0.0
    %v1716 = vmax.f32 %v1582, 0.0
    %v1717 = vmax.f32 %v1585, 0.0
    %v1718 = vmax.f32 %v1590, 0.0
    %v1719 = vmax.f32 %v1593, 0.0
    %v1720 = vmax.f32 %v1598, 0.0
    %v1721 = vmax.f32 %v1601, 0.0
    %v1722 = vmax.f32 %v1606, 0.0
    %v1723 = vmax.f32 %v1609, 0.0
    %v1724 = vmax.f32 %v1614, 0.0
    %v1725 = vmax.f32 %v1617, 0.0
    %v1726 = vmax.f32 %v1622, 0.0
    %v1727 = vmax.f32 %v1625, 0.0
    %v1728 = vmax.f32 %v1630, 0.0
    %v1729 = vmax.f32 %v1633, 0.0
    %v1730 = vmax.f32 %v1638, 0.0
    %v1731 = vmax.f32 %v1641, 0.0
    %v1732 = vmax.f32 %v1646, 0.0
    %v1733 = vmax.f32 %v1649, 0.0
    %v1734 = vmax.f32 %v1654, 0.0
    %v1735 = vmax.f32 %v1657, 0.0
    %v1736 = vmax.f32 %v1662, 0.0
    %v1737 = vmax.f32 %v1665, 0.0
    %v1738 = vmax.f32 %v1670, 0.0
    %v1739 = vmax.f32 %v1673, 0.0
    %v1740 = vpack.c.bf16 %v1677, %v1676
    %v1741 = vpack.c.bf16 %v1679, %v1678
    %v1742 = vpack.c.bf16 %v1681, %v1680
    %v1743 = vpack.c.bf16 %v1683, %v1682
    %v1744 = vpack.c.bf16 %v1685, %v1684
    %v1745 = vpack.c.bf16 %v1687, %v1686
    %v1746 = vpack.c.bf16 %v1689, %v1688
    %v1747 = vpack.c.bf16 %v1691, %v1690
    %v1748 = vpack.c.bf16 %v1693, %v1692
    %v1749 = vpack.c.bf16 %v1695, %v1694
    %v1750 = vpack.c.bf16 %v1697, %v1696
    %v1751 = vpack.c.bf16 %v1699, %v1698
    %v1752 = vpack.c.bf16 %v1701, %v1700
    %v1753 = vpack.c.bf16 %v1703, %v1702
    %v1754 = vpack.c.bf16 %v1705, %v1704
    %v1755 = vpack.c.bf16 %v1707, %v1706
    %v1756 = vpack.c.bf16 %v1709, %v1708
    %v1757 = vpack.c.bf16 %v1711, %v1710
    %v1758 = vpack.c.bf16 %v1713, %v1712
    %v1759 = vpack.c.bf16 %v1715, %v1714
    %v1760 = vpack.c.bf16 %v1717, %v1716
    %v1761 = vpack.c.bf16 %v1719, %v1718
    %v1762 = vpack.c.bf16 %v1721, %v1720
    %v1763 = vpack.c.bf16 %v1723, %v1722
    %v1764 = vpack.c.bf16 %v1725, %v1724
    %v1765 = vpack.c.bf16 %v1727, %v1726
    %v1766 = vpack.c.bf16 %v1729, %v1728
    %v1767 = vpack.c.bf16 %v1731, %v1730
    %v1768 = vpack.c.bf16 %v1733, %v1732
    %v1769 = vpack.c.bf16 %v1735, %v1734
    %v1770 = vpack.c.bf16 %v1737, %v1736
    %v1771 = vpack.c.bf16 %v1739, %v1738
    %v1772 = vld [vmem:[%s7] sm:$0xf]
    %s1773 = sld [smem:[#allocation2]]
    %v1774 = vstv %s1773
    %v1777 = vunpack.c.l.s4 1966171168
    %v1778 = vunpack.c.0.s8 %v1777
    %v1779 = vlaneseq
    %v1780 = vshrl.u32 %v1779, 7
    %v1781 = vsub.s32 %v1778, %v1780
    %v1782 = vrot.slane %v1772, %v1781
    %v1783 = vcombine.high %v1782, %v1782
    %v1785 = vunpack.c.l.s4 1966171168
    %v1786 = vunpack.c.0.s8 %v1785
    %v1787 = vlaneseq
    %v1788 = vshrl.u32 %v1787, 7
    %v1789 = vsub.s32 %v1786, %v1788
    %v1790 = vrot.slane %v1782, %v1789
    %v1792 = vunpack.c.l.s4 1966171168
    %v1793 = vunpack.c.0.s8 %v1792
    %v1794 = vlaneseq
    %v1795 = vshrl.u32 %v1794, 7
    %v1796 = vsub.s32 %v1793, %v1795
    %v1797 = vrot.slane %v1783, %v1796
    %v1798 = vcombine.high %v1790, %v1790
    %v1799 = vcombine.high %v1797, %v1797
    %1804 = vmatprep.subr.bf16.mxu0 0
    %1805 = vmatpush1.bf16.msra.mxu0 %v1740
    %1806 = vmatprep.subr.bf16.mxu0 0
    %1807 = vmatpush1.bf16.msra.mxu0 %v1741
    %1808 = vmatprep.subr.bf16.mxu0 0
    %1809 = vmatpush1.bf16.msra.mxu0 %v1742
    %1810 = vmatprep.subr.bf16.mxu0 0
    %1811 = vmatpush1.bf16.msra.mxu0 %v1743
    %1812 = vmatprep.subr.bf16.mxu0 0
    %1813 = vmatpush1.bf16.msra.mxu0 %v1744
    %1814 = vmatprep.subr.bf16.mxu0 0
    %1815 = vmatpush1.bf16.msra.mxu0 %v1745
    %1816 = vmatprep.subr.bf16.mxu0 0
    %1817 = vmatpush1.bf16.msra.mxu0 %v1746
    %1818 = vmatprep.subr.bf16.mxu0 0
    %1819 = vmatpush1.bf16.msra.mxu0 %v1747
    %1820 = vmatprep.subr.bf16.mxu0 0
    %1821 = vmatpush1.bf16.msra.mxu0 %v1748
    %1822 = vmatprep.subr.bf16.mxu0 0
    %1823 = vmatpush1.bf16.msra.mxu0 %v1749
    %1824 = vmatprep.subr.bf16.mxu0 0
    %1825 = vmatpush1.bf16.msra.mxu0 %v1750
    %1826 = vmatprep.subr.bf16.mxu0 0
    %1827 = vmatpush1.bf16.msra.mxu0 %v1751
    %1828 = vmatprep.subr.bf16.mxu0 0
    %1829 = vmatpush1.bf16.msra.mxu0 %v1752
    %1830 = vmatprep.subr.bf16.mxu0 0
    %1831 = vmatpush1.bf16.msra.mxu0 %v1753
    %1832 = vmatprep.subr.bf16.mxu0 0
    %1833 = vmatpush1.bf16.msra.mxu0 %v1754
    %1834 = vmatprep.subr.bf16.mxu0 0
    %1835 = vmatpush1.bf16.msra.mxu0 %v1755
    %1836 = vmatprep.mubr.bf16.mxu0 %v1797
    %1837 = vmatmul.mubr.bf16.gmra.mrb[0].mxu0 %v1790
    %v1838 = vpop.f32.mrb[0].mxu0
    %v1839 = vadd.f32 %v1774, %v1838
    %v1840 = vpop.f32.mrb[0].mxu0
    %v1841 = vpop.f32.mrb[0].mxu0
    %v1842 = vpop.f32.mrb[0].mxu0
    %1843 = vdwg.mxu0
    %1844 = vmatprep.subr.bf16.mxu0 0
    %1845 = vmatpush1.bf16.msra.mxu0 %v1756
    %1846 = vmatprep.subr.bf16.mxu0 0
    %1847 = vmatpush1.bf16.msra.mxu0 %v1757
    %1848 = vmatprep.subr.bf16.mxu0 0
    %1849 = vmatpush1.bf16.msra.mxu0 %v1758
    %1850 = vmatprep.subr.bf16.mxu0 0
    %1851 = vmatpush1.bf16.msra.mxu0 %v1759
    %1852 = vmatprep.subr.bf16.mxu0 0
    %1853 = vmatpush1.bf16.msra.mxu0 %v1760
    %1854 = vmatprep.subr.bf16.mxu0 0
    %1855 = vmatpush1.bf16.msra.mxu0 %v1761
    %1856 = vmatprep.subr.bf16.mxu0 0
    %1857 = vmatpush1.bf16.msra.mxu0 %v1762
    %1858 = vmatprep.subr.bf16.mxu0 0
    %1859 = vmatpush1.bf16.msra.mxu0 %v1763
    %1860 = vmatprep.subr.bf16.mxu0 0
    %1861 = vmatpush1.bf16.msra.mxu0 %v1764
    %1862 = vmatprep.subr.bf16.mxu0 0
    %1863 = vmatpush1.bf16.msra.mxu0 %v1765
    %1864 = vmatprep.subr.bf16.mxu0 0
    %1865 = vmatpush1.bf16.msra.mxu0 %v1766
    %1866 = vmatprep.subr.bf16.mxu0 0
    %1867 = vmatpush1.bf16.msra.mxu0 %v1767
    %1868 = vmatprep.subr.bf16.mxu0 0
    %1869 = vmatpush1.bf16.msra.mxu0 %v1768
    %1870 = vmatprep.subr.bf16.mxu0 0
    %1871 = vmatpush1.bf16.msra.mxu0 %v1769
    %1872 = vmatprep.subr.bf16.mxu0 0
    %1873 = vmatpush1.bf16.msra.mxu0 %v1770
    %1874 = vmatprep.subr.bf16.mxu0 0
    %1875 = vmatpush1.bf16.msra.mxu0 %v1771
    %1876 = vmatprep.mubr.bf16.mxu0 %v1799
    %1877 = vmatmul.mubr.bf16.gmra.mrb[0].mxu0 %v1798
    %v1878 = vpop.f32.mrb[0].mxu0
    %v1879 = vadd.f32 %v1839, %v1878
    %v1880 = vpop.f32.mrb[0].mxu0
    %v1881 = vpop.f32.mrb[0].mxu0
    %v1882 = vpop.f32.mrb[0].mxu0
    %1883 = vdwg.mxu0
    %v1884 = vtanh.pop %v1879
    %1885 = vst [vmem:[#allocation3] sm:$0x1] %v1884
    // Predicated region
    $region38: #{pebble_pallas_forward.1} parent=1 // pred_check
      _
    $region39: #{pebble_pallas_forward.1} parent=1 // pred_check_branch
      %1887 = sbr.rel (0) target = $region41
    $region40: #{pebble_pallas_forward.1} parent=1 // pred_region
      %s1889 = ssub.s32 16, 16
      %1890 = vsyncadd [#allocation4], %s1889
      %s1892 = sshll.u32 [#allocation3], 4
      %s1893 = int_to_ptr.vmem [resolvable:$true] %s1892
      %1895 = dma.vmem_to_hbm [thread:$0]  %s1893, 16, %s9, [#allocation4]
    $region41: #{pebble_pallas_forward.1} parent=1 // pred_fallthru
      _
    // Predicated region
    $region42: #{pebble_pallas_forward.1} parent=1 // pred_check
      _
    $region43: #{pebble_pallas_forward.1} parent=1 // pred_check_branch
      %1897 = sbr.rel (0) target = $region45
    $region44: #{pebble_pallas_forward.1} parent=1 // pred_region
      %1898 = dma.done [#allocation4], 16
    $region45: #{pebble_pallas_forward.1} parent=1 // pred_fallthru
      _
    %1899 = vsyncpa [#allocation4], 1

</llo_original>
